<compile_context>
chip_gen: v7x
topology: tpu7x:2x2x1
jax: 0.10.0
libtpu: 0.0.40
codegen_flags: <defaults>
</compile_context>

<pallas_src>
import functools

import jax
import jax.numpy as jnp
from jax import lax
from jax.experimental import pallas as pl
from jax.experimental.pallas import tpu as pltpu

LN_EPS = 1e-5      # PyTorch nn.LayerNorm default
LANE = 128


def _round_up(x, m):
    return (x + m - 1) // m * m


def _vmem_budget_bytes():
    """Physical VMEM capacity minus ~15% headroom (fallback: 128 MiB parts)."""
    cap = 128 << 20
    try:
        info = pltpu.get_tpu_info()
        cap = int(getattr(info, "vmem_capacity_bytes", cap) or cap)
    except Exception:
        pass
    return int(cap * 0.85)


def _const_spec(shape):
    """BlockSpec for an operand identical at every grid step: single-buffered.

    The default double-buffering on a constant index_map only burns VMEM.
    Falls back to a plain spec if this JAX has no BlockSpec.pipeline_mode.
    """
    nd = len(shape)
    imap = lambda i: (0,) * nd
    try:
        return pl.BlockSpec(shape, imap, pipeline_mode=pl.Buffered(buffer_count=1))
    except (TypeError, AttributeError):
        return pl.BlockSpec(shape, imap)


# ---------------------------------------------------------------------------
# Kernel
# ---------------------------------------------------------------------------
def _fused_layer(h, w, p, d_real, matmul_dtype, out_dtype):
    """y = LayerNorm(ReLU(h @ w + b)) computed over the first d_real features.

    h: (tile_m, d_prev_p) activations (padded lanes are exactly zero).
    w: (d_prev_p, d_cur_p) weights in matmul_dtype (padded rows/cols zero).
    p: (8, d_cur_p) f32 packed rows [bias; gamma; beta; LN-mask; zeros...].
    """
    if jnp.dtype(matmul_dtype) == jnp.float32:
        # Genuine f32 accumulation for the exact-semantics path.
        y = jnp.dot(h.astype(matmul_dtype), w,
                    preferred_element_type=jnp.float32,
                    precision=lax.Precision.HIGHEST)
    else:
        y = jnp.dot(h.astype(matmul_dtype), w,
                    preferred_element_type=jnp.float32)
    y = y + p[0:1, :]                         # bias
    y = jnp.maximum(y, 0.0)                   # ReLU
    d_pad = y.shape[-1]
    inv_n = jnp.float32(1.0 / d_real)
    # Padded lanes are exactly 0 after ReLU, so they contribute 0 to the sum.
    mean = jnp.sum(y, axis=-1, keepdims=True) * inv_n
    centered = y - mean
    if d_real != d_pad:
        # Precomputed 0/1 mask keeps padded lanes out of the variance
        # (cheaper than iota + compare + where every layer / grid step).
        centered = centered * p[3:4, :]
    var = jnp.sum(centered * centered, axis=-1, keepdims=True) * inv_n
    y = centered * lax.rsqrt(var + jnp.float32(LN_EPS))   # rsqrt -> EUP slot
    y = y * p[1:2, :] + p[2:3, :]             # gamma / beta (zero on padding)
    return y.astype(out_dtype)


def _mlp_stack_kernel(*refs, n_hidden, d_hid, d_out, matmul_dtype, act_dtype):
    if n_hidden > 0:
        (x_ref, w1_ref, p1_ref, w2_ref, p2_ref, wn_ref, pn_ref,
         xn1_ref, out_ref) = refs
    else:
        x_ref, w1_ref, p1_ref, wn_ref, pn_ref, xn1_ref, out_ref = refs
        w2_ref = p2_ref = None

    # x is already stored in matmul_dtype -> no f32 round-trip for the 1st dot.
    h = _fused_layer(x_ref[...], w1_ref[...], p1_ref[...], d_hid,
                     matmul_dtype, act_dtype)

    if n_hidden > 0:
        def body(i, hc):
            return _fused_layer(hc, w2_ref[i], p2_ref[i], d_hid,
                                matmul_dtype, act_dtype)
        # Bounded loop body (vs. fully-unrolled Python loop); unroll small
        # depths for LLO scheduler visibility.
        h = lax.fori_loop(0, n_hidden, body, h, unroll=(n_hidden <= 8))

    xn1_ref[...] = h.astype(xn1_ref.dtype)    # x_n_1 (pre-fc_n activation)
    y = _fused_layer(h, wn_ref[...], pn_ref[...], d_out,
                     matmul_dtype, jnp.float32)
    out_ref[...] = y.astype(out_ref.dtype)


@functools.partial(
    jax.jit,
    static_argnames=("n_hidden", "d_hid", "d_out", "tile_m", "matmul_dtype",
                     "out_dtype", "vmem_limit"))
def _mlp_stack_call(x_pad, w1, p1, w2, p2, wn, pn, *,
                    n_hidden, d_hid, d_out, tile_m, matmul_dtype, out_dtype,
                    vmem_limit):
    b_pad, d_in_p = x_pad.shape
    d_hid_p = w1.shape[1]
    d_out_p = wn.shape[1]
    grid = (b_pad // tile_m,)

    # Inter-layer activations stay in the matmul dtype (the next matmul needs
    # it anyway); LayerNorm statistics are still computed in f32.
    act_dtype = matmul_dtype

    # Cast matmul operands once outside the kernel (bf16 halves weight DMA
    # bytes + resident VMEM on v6e/v7x).
    w1 = w1.astype(matmul_dtype)
    wn = wn.astype(matmul_dtype)

    in_specs = [
        pl.BlockSpec((tile_m, d_in_p), lambda i: (i, 0)),   # x tile (pipelined)
        _const_spec((d_in_p, d_hid_p)),                     # fc1 W   (resident)
        _const_spec((8, d_hid_p)),                          # fc1 b/g/beta/mask
    ]
    args = [x_pad, w1, p1]
    if n_hidden > 0:
        n_stack = w2.shape[0]
        w2 = w2.astype(matmul_dtype)
        in_specs += [_const_spec((n_stack, d_hid_p, d_hid_p)),   # fc2 W stack
                     _const_spec((n_stack, 8, d_hid_p))]         # fc2 params
        args += [w2, p2]
    in_specs += [_const_spec((d_hid_p, d_out_p)),           # fc_n W
                 _const_spec((8, d_out_p))]                  # fc_n params
    args += [wn, pn]

    kernel = functools.partial(
        _mlp_stack_kernel, n_hidden=n_hidden, d_hid=d_hid, d_out=d_out,
        matmul_dtype=matmul_dtype, act_dtype=act_dtype)

    return pl.pallas_call(
        kernel,
        out_shape=(
            jax.ShapeDtypeStruct((b_pad, d_hid_p), out_dtype),   # x_n_1
            jax.ShapeDtypeStruct((b_pad, d_out_p), out_dtype),   # final out
        ),
        grid_spec=pltpu.PrefetchScalarGridSpec(
            num_scalar_prefetch=0,
            grid=grid,
            in_specs=in_specs,
            out_specs=[
                pl.BlockSpec((tile_m, d_hid_p), lambda i: (i, 0)),
                pl.BlockSpec((tile_m, d_out_p), lambda i: (i, 0)),
            ],
        ),
        compiler_params=pltpu.CompilerParams(
            dimension_semantics=("parallel",),   # batch tiles -> both v7x TCs
            vmem_limit_bytes=vmem_limit,
        ),
    )(*args)


def _pick_tile_m(batch, row_align, per_row_bytes, resident_bytes, vmem_budget):
    """Largest batch tile that (a) fits the VMEM budget after weight residency,
    (b) is a multiple of row_align, (c) targets >= 2 grid steps when possible."""
    b_al = _round_up(max(batch, 1), row_align)
    avail = max(vmem_budget - 2 * resident_bytes, row_align * per_row_bytes)
    hw_cap = max(row_align,
                 (avail // max(per_row_bytes, 1)) // row_align * row_align)
    cap = min(512, hw_cap)
    if b_al <= row_align:
        return row_align
    half = _round_up((b_al + 1) // 2, row_align)
    return max(row_align, min(cap, half))


def mlp_layer_forward(x, params, *, matmul_dtype=jnp.bfloat16, tile_m=None):
    """Pallas implementation of MLPLayer.forward. Returns (x_out, x_n_1)."""
    input_dim, hidden_size, out_dim, layer_N = params["dims"]
    pp = params["padded"]
    batch, d_in = x.shape
    d_in_p, d_hid_p = pp["w1"].shape
    d_out_p = pp["wn"].shape[1]
    n_hidden = layer_N - 1
    out_dtype = x.dtype

    w_bytes = jnp.dtype(matmul_dtype).itemsize
    row_align = 16 if w_bytes < 4 else 8     # bf16 packs 16 rows per vreg

    # --- generation-aware VMEM budgeting -----------------------------------
    resident = ((d_in_p * d_hid_p + n_hidden * d_hid_p * d_hid_p
                 + d_hid_p * d_out_p) * w_bytes
                + (n_hidden + 2) * 8 * max(d_hid_p, d_out_p) * 4)
    per_row = (2 * d_in_p * w_bytes          # double-buffered input tile
               + 2 * d_hid_p * 4             # double-buffered x_n_1 out tile
               + 2 * d_out_p * 4             # double-buffered final out tile
               + 4 * d_hid_p * 4)            # f32 LN working set headroom
    budget = _vmem_budget_bytes()            # ~108 MiB v5e/v6e, ~54 MiB v7x
    if tile_m is None:
        tile_m = _pick_tile_m(batch, row_align, per_row, resident, budget)
    vmem_limit = int(min(budget,
                         max(2 * resident + tile_m * per_row + (2 << 20),
                             16 << 20)))
    # TODO(synk): for d_hid*layer_N too large for full weight residency (e.g.
    # d_hid >= 4096 on v7x's 64 MiB VMEM), add a hidden-layer grid axis
    # ("arbitrary"), carry h in a VMEM scratch accumulator (init/finalize via
    # pl.when), and stream w2 blocks with pipeline_mode=pl.Buffered(2).

    b_pad = _round_up(batch, tile_m)

    # Zero-pad batch rows (sliced off below) and feature lanes (inert: padded
    # weight rows/cols are zero).  Stored directly in the matmul dtype so the
    # per-tile input DMA is half-width on the bf16 path.
    x_pad = jnp.pad(x.astype(matmul_dtype),
                    ((0, b_pad - batch), (0, d_in_p - d_in)))

    xn1_p, out_p = _mlp_stack_call(
        x_pad, pp["w1"], pp["p1"], pp["w2"], pp["p2"], pp["wn"], pp["pn"],
        n_hidden=n_hidden, d_hid=hidden_size, d_out=out_dim,
        tile_m=tile_m, matmul_dtype=matmul_dtype, out_dtype=out_dtype,
        vmem_limit=vmem_limit)

    return out_p[:batch, :out_dim], xn1_p[:batch, :hidden_size]


# ---------------------------------------------------------------------------
# Parameter construction matching the torch init:
#   nn.init.orthogonal_(weight, gain=calculate_gain('relu'))  ;  bias = 0
#   LayerNorm: weight = 1, bias = 0
# Weights are stored as PyTorch weight.T ([d_in, d_out]) and zero-padded to
# 128-lane multiples once, here, so every kernel access is lane-dense.
# ---------------------------------------------------------------------------
def _orthogonal(key, rows, cols, gain):
    a = jax.random.normal(key, (max(rows, cols), min(rows, cols)), jnp.float32)
    q, r = jnp.linalg.qr(a)
    q = q * jnp.sign(jnp.diag(r))
    if rows < cols:
        q = q.T
    return gain * q[:rows, :cols]


def make_mlp_params(key, input_dim, hidden_size, layer_N, out_dim):
    gain = 2.0 ** 0.5  # calculate_gain('relu')
    keys = jax.random.split(key, 3)

    def raw_layer(k, d_in, d_out):
        # torch Linear weight is [d_out, d_in]; we store its transpose.
        w = _orthogonal(k, d_out, d_in, gain).T
        return dict(w=w,
                    b=jnp.zeros((d_out,), jnp.float32),
                    gamma=jnp.ones((d_out,), jnp.float32),
                    beta=jnp.zeros((d_out,), jnp.float32))

    fc1 = raw_layer(keys[0], input_dim, hidden_size)
    # get_clones(fc_h, layer_N): all clones share identical initial weights;
    # forward only uses the first layer_N - 1 of them.
    fc_h = raw_layer(keys[1], hidden_size, hidden_size)
    fc2 = [fc_h for _ in range(layer_N)]
    fc_n = raw_layer(keys[2], hidden_size, out_dim)

    d_in_p = _round_up(input_dim, LANE)
    d_hid_p = _round_up(hidden_size, LANE)
    d_out_p = _round_up(out_dim, LANE)
    n_hidden = layer_N - 1

    def pad_w(w, rp, cp):
        return jnp.pad(w, ((0, rp - w.shape[0]), (0, cp - w.shape[1])))

    def pack_p(layer, cp):
        # rows: [bias, gamma, beta, LN pad-mask, 0...]; padded lanes stay 0.
        d = layer["b"].shape[0]
        p = jnp.zeros((8, cp), jnp.float32)
        p = p.at[0, :d].set(layer["b"])
        p = p.at[1, :d].set(layer["gamma"])
        p = p.at[2, :d].set(layer["beta"])
        p = p.at[3, :d].set(1.0)
        return p

    if n_hidden > 0:
        w2_stack = jnp.stack([pad_w(fc2[i]["w"], d_hid_p, d_hid_p)
                              for i in range(n_hidden)])
        p2_stack = jnp.stack([pack_p(fc2[i], d_hid_p) for i in range(n_hidden)])
    else:  # layer_N == 1: no hidden stack at all (nothing DMA'd for it)
        w2_stack = None
        p2_stack = None

    padded = dict(
        w1=pad_w(fc1["w"], d_in_p, d_hid_p), p1=pack_p(fc1, d_hid_p),
        w2=w2_stack, p2=p2_stack,
        wn=pad_w(fc_n["w"], d_hid_p, d_out_p), pn=pack_p(fc_n, d_out_p),
    )
    return dict(dims=(input_dim, hidden_size, out_dim, layer_N),
                padded=padded,
                raw=dict(fc1=fc1, fc2=fc2, fc_n=fc_n))


# ---------------------------------------------------------------------------
# Pure-JAX reference (unpadded, f32) for correctness checks.
# ---------------------------------------------------------------------------
def _ref_layer(x, p):
    y = x @ p["w"] + p["b"]
    y = jnp.maximum(y, 0.0)
    mean = jnp.mean(y, axis=-1, keepdims=True)
    var = jnp.mean((y - mean) ** 2, axis=-1, keepdims=True)
    return (y - mean) / jnp.sqrt(var + LN_EPS) * p["gamma"] + p["beta"]


def _ref_forward(x, params):
    raw = params["raw"]
    layer_N = params["dims"][3]
    x = _ref_layer(x, raw["fc1"])
    for i in range(layer_N - 1):
        x = _ref_layer(x, raw["fc2"][i])
    x_n_1 = x
    x = _ref_layer(x, raw["fc_n"])
    return x, x_n_1


if __name__ == "__main__":
    key = jax.random.PRNGKey(0)
    k_param, k_x = jax.random.split(key)

    batch = 8
    input_dim = 16
    hidden_size = 32
    layer_N = 2
    out_dim = 32

    params = make_mlp_params(k_param, input_dim, hidden_size, layer_N, out_dim)
    x = jax.random.normal(k_x, (batch, input_dim), jnp.float32)

    ref_out, ref_n1 = _ref_forward(x, params)

    # Exact-semantics check: f32 matmul path (precision=HIGHEST) vs pure JAX.
    out32, n1_32 = mlp_layer_forward(x, params, matmul_dtype=jnp.float32)
    jax.block_until_ready((out32, n1_32))
    assert out32.shape == (batch, out_dim)
    assert n1_32.shape == (batch, hidden_size)
    assert jnp.allclose(out32, ref_out, atol=1e-4, rtol=1e-4)
    assert jnp.allclose(n1_32, ref_n1, atol=1e-4, rtol=1e-4)

    # Default perf path: bf16 matmul operands + bf16 inter-layer activations,
    # f32 accumulation / LayerNorm statistics.
    out_bf, n1_bf = mlp_layer_forward(x, params)
    jax.block_until_ready((out_bf, n1_bf))
    assert jnp.allclose(out_bf, ref_out, atol=3e-2, rtol=3e-2)
    assert jnp.allclose(n1_bf, ref_n1, atol=3e-2, rtol=3e-2)

    # layer_N == 1 path: hidden-weight stack dropped from the call signature.
    params1 = make_mlp_params(k_param, input_dim, hidden_size, 1, out_dim)
    ref1_out, ref1_n1 = _ref_forward(x, params1)
    out1, n1_1 = mlp_layer_forward(x, params1, matmul_dtype=jnp.float32)
    jax.block_until_ready((out1, n1_1))
    assert jnp.allclose(out1, ref1_out, atol=1e-4, rtol=1e-4)
    assert jnp.allclose(n1_1, ref1_n1, atol=1e-4, rtol=1e-4)

    print("KERNEL_OK")
</pallas_src>

<mosaic_0001>
module attributes {stable_mosaic.version = 11 : i64} {
  func.func @_mlp_stack_kernel(%arg0: i32, %arg1: memref<8x128xf32, #tpu.memory_space<vmem>>, %arg2: memref<128x128xf32, #tpu.memory_space<vmem>>, %arg3: memref<8x128xf32, #tpu.memory_space<vmem>>, %arg4: memref<1x128x128xf32, #tpu.memory_space<vmem>>, %arg5: memref<1x8x128xf32, #tpu.memory_space<vmem>>, %arg6: memref<128x128xf32, #tpu.memory_space<vmem>>, %arg7: memref<8x128xf32, #tpu.memory_space<vmem>>, %arg8: memref<8x128xf32, #tpu.memory_space<vmem>>, %arg9: memref<8x128xf32, #tpu.memory_space<vmem>>) attributes {dimension_semantics = [#tpu.dimension_semantics<parallel>], iteration_bounds = array<i64: 1>, scalar_prefetch = 0 : i64, scratch_operands = 0 : i64, tpu.core_type = #tpu.core_type<tc>, window_params = [{transform_indices = @transform_0, window_bounds = array<i64: 8, 128>}, {pipeline_mode = #tpu.pipeline_mode<synchronous>, transform_indices = @transform_1, window_bounds = array<i64: 128, 128>}, {pipeline_mode = #tpu.pipeline_mode<synchronous>, transform_indices = @transform_2, window_bounds = array<i64: 8, 128>}, {pipeline_mode = #tpu.pipeline_mode<synchronous>, transform_indices = @transform_3, window_bounds = array<i64: 1, 128, 128>}, {pipeline_mode = #tpu.pipeline_mode<synchronous>, transform_indices = @transform_4, window_bounds = array<i64: 1, 8, 128>}, {pipeline_mode = #tpu.pipeline_mode<synchronous>, transform_indices = @transform_5, window_bounds = array<i64: 128, 128>}, {pipeline_mode = #tpu.pipeline_mode<synchronous>, transform_indices = @transform_6, window_bounds = array<i64: 8, 128>}, {transform_indices = @transform_7, window_bounds = array<i64: 8, 128>}, {transform_indices = @transform_8, window_bounds = array<i64: 8, 128>}]} {
    %c0 = arith.constant 0 : index
    %c0_0 = arith.constant 0 : index
    %0 = vector.load %arg1[%c0, %c0_0] : memref<8x128xf32, #tpu.memory_space<vmem>>, vector<8x128xf32>
    %c0_1 = arith.constant 0 : index
    %c0_2 = arith.constant 0 : index
    %1 = vector.load %arg2[%c0_1, %c0_2] : memref<128x128xf32, #tpu.memory_space<vmem>>, vector<128x128xf32>
    %c0_3 = arith.constant 0 : index
    %c0_4 = arith.constant 0 : index
    %2 = vector.load %arg3[%c0_3, %c0_4] : memref<8x128xf32, #tpu.memory_space<vmem>>, vector<8x128xf32>
    %cst = arith.constant dense<0.000000e+00> : vector<8x128xf32>
    %3 = tpu.matmul %0, %1, %cst {dimension_numbers = #tpu.dot_dimension_numbers<[1], [0], [0], [1], [0, 0, 1, 1], [], []>, precision = #tpu.contract_precision<fp32>} : vector<8x128xf32>, vector<128x128xf32>, vector<8x128xf32> -> vector<8x128xf32>
    %4 = vector.extract_strided_slice %2 {offsets = [0, 0], sizes = [1, 128], strides = [1, 1]} : vector<8x128xf32> to vector<1x128xf32>
    %5 = vector.broadcast %4 : vector<1x128xf32> to vector<8x128xf32>
    %6 = arith.addf %3, %5 : vector<8x128xf32>
    %cst_5 = arith.constant 0.000000e+00 : f32
    %7 = vector.broadcast %cst_5 : f32 to vector<8x128xf32>
    %8 = arith.maximumf %6, %7 : vector<8x128xf32>
    %cst_6 = arith.constant dense<0.000000e+00> : vector<8xf32>
    %9 = vector.multi_reduction <add>, %8, %cst_6 [1] : vector<8x128xf32> to vector<8xf32>
    %10 = vector.shape_cast %9 : vector<8xf32> to vector<8x1xf32>
    %cst_7 = arith.constant 3.125000e-02 : f32
    %11 = vector.broadcast %cst_7 : f32 to vector<8x1xf32>
    %12 = arith.mulf %10, %11 : vector<8x1xf32>
    %13 = vector.broadcast %12 : vector<8x1xf32> to vector<8x128xf32>
    %14 = arith.subf %8, %13 : vector<8x128xf32>
    %15 = vector.extract_strided_slice %2 {offsets = [3, 0], sizes = [1, 128], strides = [1, 1]} : vector<8x128xf32> to vector<1x128xf32>
    %16 = vector.broadcast %15 : vector<1x128xf32> to vector<8x128xf32>
    %17 = arith.mulf %14, %16 : vector<8x128xf32>
    %18 = arith.mulf %17, %17 : vector<8x128xf32>
    %cst_8 = arith.constant dense<0.000000e+00> : vector<8xf32>
    %19 = vector.multi_reduction <add>, %18, %cst_8 [1] : vector<8x128xf32> to vector<8xf32>
    %20 = vector.shape_cast %19 : vector<8xf32> to vector<8x1xf32>
    %cst_9 = arith.constant 3.125000e-02 : f32
    %21 = vector.broadcast %cst_9 : f32 to vector<8x1xf32>
    %22 = arith.mulf %20, %21 : vector<8x1xf32>
    %cst_10 = arith.constant 9.99999974E-6 : f32
    %23 = vector.broadcast %cst_10 : f32 to vector<8x1xf32>
    %24 = arith.addf %22, %23 : vector<8x1xf32>
    %25 = math.rsqrt %24 : vector<8x1xf32>
    %26 = vector.broadcast %25 : vector<8x1xf32> to vector<8x128xf32>
    %27 = arith.mulf %17, %26 : vector<8x128xf32>
    %28 = vector.extract_strided_slice %2 {offsets = [1, 0], sizes = [1, 128], strides = [1, 1]} : vector<8x128xf32> to vector<1x128xf32>
    %29 = vector.broadcast %28 : vector<1x128xf32> to vector<8x128xf32>
    %30 = arith.mulf %27, %29 : vector<8x128xf32>
    %31 = vector.extract_strided_slice %2 {offsets = [2, 0], sizes = [1, 128], strides = [1, 1]} : vector<8x128xf32> to vector<1x128xf32>
    %32 = vector.broadcast %31 : vector<1x128xf32> to vector<8x128xf32>
    %33 = arith.addf %30, %32 : vector<8x128xf32>
    %c0_i32 = arith.constant 0 : i32
    %34 = arith.index_cast %c0_i32 : i32 to index
    %c0_11 = arith.constant 0 : index
    %c0_12 = arith.constant 0 : index
    %35 = vector.load %arg4[%34, %c0_11, %c0_12] : memref<1x128x128xf32, #tpu.memory_space<vmem>>, vector<1x128x128xf32>
    %36 = vector.shape_cast %35 : vector<1x128x128xf32> to vector<128x128xf32>
    %37 = arith.index_cast %c0_i32 : i32 to index
    %c0_13 = arith.constant 0 : index
    %c0_14 = arith.constant 0 : index
    %38 = vector.load %arg5[%37, %c0_13, %c0_14] : memref<1x8x128xf32, #tpu.memory_space<vmem>>, vector<1x8x128xf32>
    %39 = vector.shape_cast %38 : vector<1x8x128xf32> to vector<8x128xf32>
    %cst_15 = arith.constant dense<0.000000e+00> : vector<8x128xf32>
    %40 = tpu.matmul %33, %36, %cst_15 {dimension_numbers = #tpu.dot_dimension_numbers<[1], [0], [0], [1], [0, 0, 1, 1], [], []>, precision = #tpu.contract_precision<fp32>} : vector<8x128xf32>, vector<128x128xf32>, vector<8x128xf32> -> vector<8x128xf32>
    %41 = vector.extract_strided_slice %39 {offsets = [0, 0], sizes = [1, 128], strides = [1, 1]} : vector<8x128xf32> to vector<1x128xf32>
    %42 = vector.broadcast %41 : vector<1x128xf32> to vector<8x128xf32>
    %43 = arith.addf %40, %42 : vector<8x128xf32>
    %cst_16 = arith.constant 0.000000e+00 : f32
    %44 = vector.broadcast %cst_16 : f32 to vector<8x128xf32>
    %45 = arith.maximumf %43, %44 : vector<8x128xf32>
    %cst_17 = arith.constant dense<0.000000e+00> : vector<8xf32>
    %46 = vector.multi_reduction <add>, %45, %cst_17 [1] : vector<8x128xf32> to vector<8xf32>
    %47 = vector.shape_cast %46 : vector<8xf32> to vector<8x1xf32>
    %cst_18 = arith.constant 3.125000e-02 : f32
    %48 = vector.broadcast %cst_18 : f32 to vector<8x1xf32>
    %49 = arith.mulf %47, %48 : vector<8x1xf32>
    %50 = vector.broadcast %49 : vector<8x1xf32> to vector<8x128xf32>
    %51 = arith.subf %45, %50 : vector<8x128xf32>
    %52 = vector.extract_strided_slice %39 {offsets = [3, 0], sizes = [1, 128], strides = [1, 1]} : vector<8x128xf32> to vector<1x128xf32>
    %53 = vector.broadcast %52 : vector<1x128xf32> to vector<8x128xf32>
    %54 = arith.mulf %51, %53 : vector<8x128xf32>
    %55 = arith.mulf %54, %54 : vector<8x128xf32>
    %cst_19 = arith.constant dense<0.000000e+00> : vector<8xf32>
    %56 = vector.multi_reduction <add>, %55, %cst_19 [1] : vector<8x128xf32> to vector<8xf32>
    %57 = vector.shape_cast %56 : vector<8xf32> to vector<8x1xf32>
    %cst_20 = arith.constant 3.125000e-02 : f32
    %58 = vector.broadcast %cst_20 : f32 to vector<8x1xf32>
    %59 = arith.mulf %57, %58 : vector<8x1xf32>
    %cst_21 = arith.constant 9.99999974E-6 : f32
    %60 = vector.broadcast %cst_21 : f32 to vector<8x1xf32>
    %61 = arith.addf %59, %60 : vector<8x1xf32>
    %62 = math.rsqrt %61 : vector<8x1xf32>
    %63 = vector.broadcast %62 : vector<8x1xf32> to vector<8x128xf32>
    %64 = arith.mulf %54, %63 : vector<8x128xf32>
    %65 = vector.extract_strided_slice %39 {offsets = [1, 0], sizes = [1, 128], strides = [1, 1]} : vector<8x128xf32> to vector<1x128xf32>
    %66 = vector.broadcast %65 : vector<1x128xf32> to vector<8x128xf32>
    %67 = arith.mulf %64, %66 : vector<8x128xf32>
    %68 = vector.extract_strided_slice %39 {offsets = [2, 0], sizes = [1, 128], strides = [1, 1]} : vector<8x128xf32> to vector<1x128xf32>
    %69 = vector.broadcast %68 : vector<1x128xf32> to vector<8x128xf32>
    %70 = arith.addf %67, %69 : vector<8x128xf32>
    %c1_i32 = arith.constant 1 : i32
    %c0_22 = arith.constant 0 : index
    %c0_23 = arith.constant 0 : index
    %71 = vector.load %arg8[%c0_22, %c0_23] : memref<8x128xf32, #tpu.memory_space<vmem>>, vector<8x128xf32>
    tpu.vector_store %arg8[%c0_22, %c0_23], %70 {strides = array<i32>} : memref<8x128xf32, #tpu.memory_space<vmem>>, vector<8x128xf32>,
    %c0_24 = arith.constant 0 : index
    %c0_25 = arith.constant 0 : index
    %72 = vector.load %arg6[%c0_24, %c0_25] : memref<128x128xf32, #tpu.memory_space<vmem>>, vector<128x128xf32>
    %c0_26 = arith.constant 0 : index
    %c0_27 = arith.constant 0 : index
    %73 = vector.load %arg7[%c0_26, %c0_27] : memref<8x128xf32, #tpu.memory_space<vmem>>, vector<8x128xf32>
    %cst_28 = arith.constant dense<0.000000e+00> : vector<8x128xf32>
    %74 = tpu.matmul %70, %72, %cst_28 {dimension_numbers = #tpu.dot_dimension_numbers<[1], [0], [0], [1], [0, 0, 1, 1], [], []>, precision = #tpu.contract_precision<fp32>} : vector<8x128xf32>, vector<128x128xf32>, vector<8x128xf32> -> vector<8x128xf32>
    %75 = vector.extract_strided_slice %73 {offsets = [0, 0], sizes = [1, 128], strides = [1, 1]} : vector<8x128xf32> to vector<1x128xf32>
    %76 = vector.broadcast %75 : vector<1x128xf32> to vector<8x128xf32>
    %77 = arith.addf %74, %76 : vector<8x128xf32>
    %cst_29 = arith.constant 0.000000e+00 : f32
    %78 = vector.broadcast %cst_29 : f32 to vector<8x128xf32>
    %79 = arith.maximumf %77, %78 : vector<8x128xf32>
    %cst_30 = arith.constant dense<0.000000e+00> : vector<8xf32>
    %80 = vector.multi_reduction <add>, %79, %cst_30 [1] : vector<8x128xf32> to vector<8xf32>
    %81 = vector.shape_cast %80 : vector<8xf32> to vector<8x1xf32>
    %cst_31 = arith.constant 3.125000e-02 : f32
    %82 = vector.broadcast %cst_31 : f32 to vector<8x1xf32>
    %83 = arith.mulf %81, %82 : vector<8x1xf32>
    %84 = vector.broadcast %83 : vector<8x1xf32> to vector<8x128xf32>
    %85 = arith.subf %79, %84 : vector<8x128xf32>
    %86 = vector.extract_strided_slice %73 {offsets = [3, 0], sizes = [1, 128], strides = [1, 1]} : vector<8x128xf32> to vector<1x128xf32>
    %87 = vector.broadcast %86 : vector<1x128xf32> to vector<8x128xf32>
    %88 = arith.mulf %85, %87 : vector<8x128xf32>
    %89 = arith.mulf %88, %88 : vector<8x128xf32>
    %cst_32 = arith.constant dense<0.000000e+00> : vector<8xf32>
    %90 = vector.multi_reduction <add>, %89, %cst_32 [1] : vector<8x128xf32> to vector<8xf32>
    %91 = vector.shape_cast %90 : vector<8xf32> to vector<8x1xf32>
    %cst_33 = arith.constant 3.125000e-02 : f32
    %92 = vector.broadcast %cst_33 : f32 to vector<8x1xf32>
    %93 = arith.mulf %91, %92 : vector<8x1xf32>
    %cst_34 = arith.constant 9.99999974E-6 : f32
    %94 = vector.broadcast %cst_34 : f32 to vector<8x1xf32>
    %95 = arith.addf %93, %94 : vector<8x1xf32>
    %96 = math.rsqrt %95 : vector<8x1xf32>
    %97 = vector.broadcast %96 : vector<8x1xf32> to vector<8x128xf32>
    %98 = arith.mulf %88, %97 : vector<8x128xf32>
    %99 = vector.extract_strided_slice %73 {offsets = [1, 0], sizes = [1, 128], strides = [1, 1]} : vector<8x128xf32> to vector<1x128xf32>
    %100 = vector.broadcast %99 : vector<1x128xf32> to vector<8x128xf32>
    %101 = arith.mulf %98, %100 : vector<8x128xf32>
    %102 = vector.extract_strided_slice %73 {offsets = [2, 0], sizes = [1, 128], strides = [1, 1]} : vector<8x128xf32> to vector<1x128xf32>
    %103 = vector.broadcast %102 : vector<1x128xf32> to vector<8x128xf32>
    %104 = arith.addf %101, %103 : vector<8x128xf32>
    %c0_35 = arith.constant 0 : index
    %c0_36 = arith.constant 0 : index
    %105 = vector.load %arg9[%c0_35, %c0_36] : memref<8x128xf32, #tpu.memory_space<vmem>>, vector<8x128xf32>
    tpu.vector_store %arg9[%c0_35, %c0_36], %104 {strides = array<i32>} : memref<8x128xf32, #tpu.memory_space<vmem>>, vector<8x128xf32>,
    return
  }
  func.func @transform_0(%arg0: i32) -> (i32, i32) {
    %c0_i32 = arith.constant 0 : i32
    %c0_i32_0 = arith.constant 0 : i32
    return %arg0, %c0_i32 : i32, i32
  }
  func.func @transform_1(%arg0: i32) -> (i32, i32) {
    %c0_i32 = arith.constant 0 : i32
    %c0_i32_0 = arith.constant 0 : i32
    %c0_i32_1 = arith.constant 0 : i32
    return %c0_i32, %c0_i32_0 : i32, i32
  }
  func.func @transform_2(%arg0: i32) -> (i32, i32) {
    %c0_i32 = arith.constant 0 : i32
    %c0_i32_0 = arith.constant 0 : i32
    %c0_i32_1 = arith.constant 0 : i32
    return %c0_i32, %c0_i32_0 : i32, i32
  }
  func.func @transform_3(%arg0: i32) -> (i32, i32, i32) {
    %c0_i32 = arith.constant 0 : i32
    %c0_i32_0 = arith.constant 0 : i32
    %c0_i32_1 = arith.constant 0 : i32
    %c0_i32_2 = arith.constant 0 : i32
    return %c0_i32, %c0_i32_0, %c0_i32_1 : i32, i32, i32
  }
  func.func @transform_4(%arg0: i32) -> (i32, i32, i32) {
    %c0_i32 = arith.constant 0 : i32
    %c0_i32_0 = arith.constant 0 : i32
    %c0_i32_1 = arith.constant 0 : i32
    %c0_i32_2 = arith.constant 0 : i32
    return %c0_i32, %c0_i32_0, %c0_i32_1 : i32, i32, i32
  }
  func.func @transform_5(%arg0: i32) -> (i32, i32) {
    %c0_i32 = arith.constant 0 : i32
    %c0_i32_0 = arith.constant 0 : i32
    %c0_i32_1 = arith.constant 0 : i32
    return %c0_i32, %c0_i32_0 : i32, i32
  }
  func.func @transform_6(%arg0: i32) -> (i32, i32) {
    %c0_i32 = arith.constant 0 : i32
    %c0_i32_0 = arith.constant 0 : i32
    %c0_i32_1 = arith.constant 0 : i32
    return %c0_i32, %c0_i32_0 : i32, i32
  }
  func.func @transform_7(%arg0: i32) -> (i32, i32) {
    %c0_i32 = arith.constant 0 : i32
    %c0_i32_0 = arith.constant 0 : i32
    return %arg0, %c0_i32 : i32, i32
  }
  func.func @transform_8(%arg0: i32) -> (i32, i32) {
    %c0_i32 = arith.constant 0 : i32
    %c0_i32_0 = arith.constant 0 : i32
    return %arg0, %c0_i32 : i32, i32
  }
}

</mosaic_0001>

<llo_original>
// kernel: _mlp_stack_call.1
$region0: #{_mlp_stack_call.1}
  #allocation0 [shape = 'u32[]', space=smem, size = 0x4, offset = 0x4, fixed_abs, tag = 'smem constant byte address 0x4 - core index']
  #allocation1 [shape = 'u32[144,128]{1,0:T(1,128)}', space=vmem, size = 0x12000, scoped, tag = 'internal scratch']
  %s0 = inlined_call_operand.hbm [shape: f32[8,128], index: 0, kind: input, shape index: {}]
  %s1 = inlined_call_operand.hbm [shape: f32[128,128], index: 1, kind: input, shape index: {}]
  %s2 = inlined_call_operand.hbm [shape: f32[8,128], index: 2, kind: input, shape index: {}]
  %s3 = inlined_call_operand.hbm [shape: f32[1,128,128], index: 3, kind: input, shape index: {}]
  %s4 = inlined_call_operand.vmem [shape: f32[1,8,128], index: 4, kind: input, shape index: {}]
  %s5 = inlined_call_operand.hbm [shape: f32[128,128], index: 5, kind: input, shape index: {}]
  %s6 = inlined_call_operand.vmem [shape: f32[8,128], index: 6, kind: input, shape index: {}]
  %s7 = inlined_call_operand.hbm [shape: f32[8,128], index: 7, kind: output, shape index: {0}]
  %s8 = inlined_call_operand.hbm [shape: f32[8,128], index: 8, kind: output, shape index: {1}]
  %9 = xla_tuple %s7, %s8
  %s10 = sld [smem:[#allocation0]]
  $region66: #{_mlp_stack_call.1} parent=0
    _
  %s12 = ssub.s32 1, %s10
  %s13 = scalar_select 0, %s12, %s10
  $region1: #{_mlp_stack_call.1} parent=0
    #allocation2 [shape = 'u8[4096]{0}', space=vmem, size = 0x1000, scoped, tag = 'input window, operand 0, single buffered']
    #allocation3 [shape = 's32[1]{0}', space=sflag, size = 0x4, scoped, tag = 'scoped memory for _mlp_stack_call.1']
    #allocation4 [shape = 's32[1]{0}', space=sflag, size = 0x4, scoped, tag = 'scoped memory for _mlp_stack_call.1']
    #allocation5 [shape = 'u8[65536]{0}', space=vmem, size = 0x10000, scoped, tag = 'input window, operand 1, single buffered']
    #allocation6 [shape = 's32[1]{0}', space=sflag, size = 0x4, scoped, tag = 'scoped memory for _mlp_stack_call.1']
    #allocation7 [shape = 'u8[4096]{0}', space=vmem, size = 0x1000, scoped, tag = 'input window, operand 2, single buffered']
    #allocation8 [shape = 'u8[65536]{0}', space=vmem, size = 0x10000, scoped, tag = 'input window, operand 3, single buffered']
    #allocation9 [shape = 's32[1]{0}', space=sflag, size = 0x4, scoped, tag = 'scoped memory for _mlp_stack_call.1']
    #allocation10 [shape = 'u8[65536]{0}', space=vmem, size = 0x10000, scoped, tag = 'input window, operand 5, single buffered']
    #allocation11 [shape = 'u8[4096]{0}', space=vmem, size = 0x1000, scoped, tag = 'output window, operand 0, single buffered']
    #allocation12 [shape = 'u8[4096]{0}', space=vmem, size = 0x1000, scoped, tag = 'output window, operand 1, single buffered']
    #allocation13 [shape = 's32[1]{0}', space=sflag, size = 0x4, scoped, tag = 'scoped memory for _mlp_stack_call.1']
    %14 = vsyncpa [#allocation3], 0
    %15 = vsyncpa [#allocation6], 0
    %16 = vsyncpa [#allocation9], 0
    %17 = vsyncpa [#allocation4], 0
    %18 = vsyncpa [#allocation13], 0
    // Predicated region
    $region2: #{_mlp_stack_call.1} parent=1 // pred_check
      _
    $region3: #{_mlp_stack_call.1} parent=1 // pred_check_branch
      %20 = sbr.rel (0) target = $region5
    $region4: #{_mlp_stack_call.1} parent=1 // pred_region
      %s22 = ssub.s32 128, 128
      %23 = vsyncadd [#allocation3], %s22
      %s25 = sshll.u32 [#allocation2], 4
      %s26 = int_to_ptr.vmem [resolvable:$true] %s25
      %28 = dma.hbm_to_vmem [thread:$0]  %s0, 128, %s26, [#allocation3]
    $region5: #{_mlp_stack_call.1} parent=1 // pred_fallthru
      _
    // Predicated region
    $region6: #{_mlp_stack_call.1} parent=1 // pred_check
      _
    $region7: #{_mlp_stack_call.1} parent=1 // pred_check_branch
      %30 = sbr.rel (0) target = $region9
    $region8: #{_mlp_stack_call.1} parent=1 // pred_region
      %s32 = ssub.s32 2048, 2048
      %33 = vsyncadd [#allocation6], %s32
      %s34 = sshll.u32 [#allocation5], 4
      %s35 = int_to_ptr.vmem [resolvable:$true] %s34
      %40 = dma.hbm_to_vmem [thread:$0]  %s1, 2048, %s35, [#allocation6], 128, 128, 8
    $region9: #{_mlp_stack_call.1} parent=1 // pred_fallthru
      _
    // Predicated region
    $region10: #{_mlp_stack_call.1} parent=1 // pred_check
      _
    $region11: #{_mlp_stack_call.1} parent=1 // pred_check_branch
      %42 = sbr.rel (0) target = $region13
    $region12: #{_mlp_stack_call.1} parent=1 // pred_region
      %s44 = ssub.s32 128, 128
      %45 = vsyncadd [#allocation6], %s44
      %s47 = sshll.u32 [#allocation7], 4
      %s48 = int_to_ptr.vmem [resolvable:$true] %s47
      %50 = dma.hbm_to_vmem [thread:$0]  %s2, 128, %s48, [#allocation6]
    $region13: #{_mlp_stack_call.1} parent=1 // pred_fallthru
      _
    // Predicated region
    $region14: #{_mlp_stack_call.1} parent=1 // pred_check
      _
    $region15: #{_mlp_stack_call.1} parent=1 // pred_check_branch
      %52 = sbr.rel (0) target = $region17
    $region16: #{_mlp_stack_call.1} parent=1 // pred_region
      %s54 = ssub.s32 2048, 2048
      %55 = vsyncadd [#allocation9], %s54
      %s56 = sshll.u32 [#allocation8], 4
      %s57 = int_to_ptr.vmem [resolvable:$true] %s56
      %62 = dma.hbm_to_vmem [thread:$0]  %s3, 2048, %s57, [#allocation9], 128, 128, 8
    $region17: #{_mlp_stack_call.1} parent=1 // pred_fallthru
      _
    // Predicated region
    $region18: #{_mlp_stack_call.1} parent=1 // pred_check
      _
    $region19: #{_mlp_stack_call.1} parent=1 // pred_check_branch
      %64 = sbr.rel (0) target = $region21
    $region20: #{_mlp_stack_call.1} parent=1 // pred_region
      _
    $region21: #{_mlp_stack_call.1} parent=1 // pred_fallthru
      _
    // Predicated region
    $region22: #{_mlp_stack_call.1} parent=1 // pred_check
      _
    $region23: #{_mlp_stack_call.1} parent=1 // pred_check_branch
      %66 = sbr.rel (0) target = $region25
    $region24: #{_mlp_stack_call.1} parent=1 // pred_region
      %s68 = ssub.s32 2048, 2048
      %69 = vsyncadd [#allocation9], %s68
      %s70 = sshll.u32 [#allocation10], 4
      %s71 = int_to_ptr.vmem [resolvable:$true] %s70
      %76 = dma.hbm_to_vmem [thread:$0]  %s5, 2048, %s71, [#allocation9], 128, 128, 8
    $region25: #{_mlp_stack_call.1} parent=1 // pred_fallthru
      _
    // Predicated region
    $region26: #{_mlp_stack_call.1} parent=1 // pred_check
      _
    $region27: #{_mlp_stack_call.1} parent=1 // pred_check_branch
      %78 = sbr.rel (0) target = $region29
    $region28: #{_mlp_stack_call.1} parent=1 // pred_region
      _
    $region29: #{_mlp_stack_call.1} parent=1 // pred_fallthru
      _
    // Predicated region
    $region30: #{_mlp_stack_call.1} parent=1 // pred_check
      _
    $region31: #{_mlp_stack_call.1} parent=1 // pred_check_branch
      %80 = sbr.rel (0) target = $region33
    $region32: #{_mlp_stack_call.1} parent=1 // pred_region
      %81 = dma.done [#allocation3], 128
    $region33: #{_mlp_stack_call.1} parent=1 // pred_fallthru
      _
    // Predicated region
    $region34: #{_mlp_stack_call.1} parent=1 // pred_check
      _
    $region35: #{_mlp_stack_call.1} parent=1 // pred_check_branch
      %83 = sbr.rel (0) target = $region37
    $region36: #{_mlp_stack_call.1} parent=1 // pred_region
      %84 = dma.done [#allocation6], 2048
    $region37: #{_mlp_stack_call.1} parent=1 // pred_fallthru
      _
    // Predicated region
    $region38: #{_mlp_stack_call.1} parent=1 // pred_check
      _
    $region39: #{_mlp_stack_call.1} parent=1 // pred_check_branch
      %86 = sbr.rel (0) target = $region41
    $region40: #{_mlp_stack_call.1} parent=1 // pred_region
      %87 = dma.done [#allocation6], 128
    $region41: #{_mlp_stack_call.1} parent=1 // pred_fallthru
      _
    // Predicated region
    $region42: #{_mlp_stack_call.1} parent=1 // pred_check
      _
    $region43: #{_mlp_stack_call.1} parent=1 // pred_check_branch
      %89 = sbr.rel (0) target = $region45
    $region44: #{_mlp_stack_call.1} parent=1 // pred_region
      %90 = dma.done [#allocation9], 2048
    $region45: #{_mlp_stack_call.1} parent=1 // pred_fallthru
      _
    // Predicated region
    $region46: #{_mlp_stack_call.1} parent=1 // pred_check
      _
    $region47: #{_mlp_stack_call.1} parent=1 // pred_check_branch
      %92 = sbr.rel (0) target = $region49
    $region48: #{_mlp_stack_call.1} parent=1 // pred_region
      %93 = dma.done [#allocation9], 2048
    $region49: #{_mlp_stack_call.1} parent=1 // pred_fallthru
      _
    %v94 = vld [vmem:[#allocation2] sm:$0xff]
    %v95 = vld [vmem:[#allocation5] sm:$0xff]
    %v96 = vld [vmem:[#allocation5 + $0x8] sm:$0xff]
    %v97 = vld [vmem:[#allocation5 + $0x10] sm:$0xff]
    %v98 = vld [vmem:[#allocation5 + $0x18] sm:$0xff]
    %v99 = vld [vmem:[#allocation5 + $0x20] sm:$0xff]
    %v100 = vld [vmem:[#allocation5 + $0x28] sm:$0xff]
    %v101 = vld [vmem:[#allocation5 + $0x30] sm:$0xff]
    %v102 = vld [vmem:[#allocation5 + $0x38] sm:$0xff]
    %v103 = vld [vmem:[#allocation5 + $0x40] sm:$0xff]
    %v104 = vld [vmem:[#allocation5 + $0x48] sm:$0xff]
    %v105 = vld [vmem:[#allocation5 + $0x50] sm:$0xff]
    %v106 = vld [vmem:[#allocation5 + $0x58] sm:$0xff]
    %v107 = vld [vmem:[#allocation5 + $0x60] sm:$0xff]
    %v108 = vld [vmem:[#allocation5 + $0x68] sm:$0xff]
    %v109 = vld [vmem:[#allocation5 + $0x70] sm:$0xff]
    %v110 = vld [vmem:[#allocation5 + $0x78] sm:$0xff]
    %v111 = vld [vmem:[#allocation7] sm:$0xff]
    %v112 = vlaneseq
    %v113 = vshrl.u32 %v112, 7
    %v114 = vsub.s32 0, %v113
    %v115 = vrot.slane %v111, %v114
    %116 = vmatprep.subr.mxu0 0.0
    %v117 = vand.u32 %v95, 4294901760
    %118 = vmatpush1.msra.mxu0 %v117
    %119 = vmatprep.subr.mxu0 0.0
    %v120 = vand.u32 %v96, 4294901760
    %121 = vmatpush1.msra.mxu0 %v120
    %122 = vmatprep.subr.mxu0 0.0
    %v123 = vand.u32 %v97, 4294901760
    %124 = vmatpush1.msra.mxu0 %v123
    %125 = vmatprep.subr.mxu0 0.0
    %v126 = vand.u32 %v98, 4294901760
    %127 = vmatpush1.msra.mxu0 %v126
    %128 = vmatprep.subr.mxu0 0.0
    %v129 = vand.u32 %v99, 4294901760
    %130 = vmatpush1.msra.mxu0 %v129
    %131 = vmatprep.subr.mxu0 0.0
    %v132 = vand.u32 %v100, 4294901760
    %133 = vmatpush1.msra.mxu0 %v132
    %134 = vmatprep.subr.mxu0 0.0
    %v135 = vand.u32 %v101, 4294901760
    %136 = vmatpush1.msra.mxu0 %v135
    %137 = vmatprep.subr.mxu0 0.0
    %v138 = vand.u32 %v102, 4294901760
    %139 = vmatpush1.msra.mxu0 %v138
    %140 = vmatprep.subr.mxu0 0.0
    %v141 = vand.u32 %v103, 4294901760
    %142 = vmatpush1.msra.mxu0 %v141
    %143 = vmatprep.subr.mxu0 0.0
    %v144 = vand.u32 %v104, 4294901760
    %145 = vmatpush1.msra.mxu0 %v144
    %146 = vmatprep.subr.mxu0 0.0
    %v147 = vand.u32 %v105, 4294901760
    %148 = vmatpush1.msra.mxu0 %v147
    %149 = vmatprep.subr.mxu0 0.0
    %v150 = vand.u32 %v106, 4294901760
    %151 = vmatpush1.msra.mxu0 %v150
    %152 = vmatprep.subr.mxu0 0.0
    %v153 = vand.u32 %v107, 4294901760
    %154 = vmatpush1.msra.mxu0 %v153
    %155 = vmatprep.subr.mxu0 0.0
    %v156 = vand.u32 %v108, 4294901760
    %157 = vmatpush1.msra.mxu0 %v156
    %158 = vmatprep.subr.mxu0 0.0
    %v159 = vand.u32 %v109, 4294901760
    %160 = vmatpush1.msra.mxu0 %v159
    %161 = vmatprep.subr.mxu0 0.0
    %v162 = vand.u32 %v110, 4294901760
    %163 = vmatpush1.msra.mxu0 %v162
    %164 = vmatprep.subr.mxu0 0.0
    %165 = vmatpush1.msra.mxu0 0.0
    %166 = vmatprep.subr.mxu0 0.0
    %167 = vmatpush1.msra.mxu0 0.0
    %168 = vmatprep.subr.mxu0 0.0
    %169 = vmatpush1.msra.mxu0 0.0
    %170 = vmatprep.subr.mxu0 0.0
    %171 = vmatpush1.msra.mxu0 0.0
    %172 = vmatprep.subr.mxu0 0.0
    %173 = vmatpush1.msra.mxu0 0.0
    %174 = vmatprep.subr.mxu0 0.0
    %175 = vmatpush1.msra.mxu0 0.0
    %176 = vmatprep.subr.mxu0 0.0
    %177 = vmatpush1.msra.mxu0 0.0
    %178 = vmatprep.subr.mxu0 0.0
    %179 = vmatpush1.msra.mxu0 0.0
    %180 = vmatprep.subr.mxu0 0.0
    %181 = vmatpush1.msra.mxu0 0.0
    %182 = vmatprep.subr.mxu0 0.0
    %183 = vmatpush1.msra.mxu0 0.0
    %184 = vmatprep.subr.mxu0 0.0
    %185 = vmatpush1.msra.mxu0 0.0
    %186 = vmatprep.subr.mxu0 0.0
    %187 = vmatpush1.msra.mxu0 0.0
    %188 = vmatprep.subr.mxu0 0.0
    %189 = vmatpush1.msra.mxu0 0.0
    %190 = vmatprep.subr.mxu0 0.0
    %191 = vmatpush1.msra.mxu0 0.0
    %192 = vmatprep.subr.mxu0 0.0
    %193 = vmatpush1.msra.mxu0 0.0
    %194 = vmatprep.subr.mxu0 0.0
    %195 = vmatpush1.msra.mxu0 0.0
    %196 = vmatprep.mubr.f32.mxu0 0.0
    %v197 = vand.u32 %v94, 4294901760
    %v198 = vsub.f32 %v94, %v197
    %v199 = vand.u32 %v198, 4294901760
    %v200 = vsub.f32 %v198, %v199
    %v201 = vand.u32 %v200, 4294901760
    %202 = vmatmul.mubr.f32.gmra.mrb[0].mxu0 %v201
    %v203 = vpop.f32.mrb[0].mxu0
    %v204 = vadd.f32 %v115, %v203
    %v205 = vpop.f32.mrb[0].mxu0
    %206 = vdwg.mxu0
    %207 = vmatprep.subr.mxu0 0.0
    %v208 = vand.u32 %v95, 4294901760
    %v209 = vsub.f32 %v95, %v208
    %v210 = vand.u32 %v209, 4294901760
    %v211 = vsub.f32 %v209, %v210
    %v212 = vand.u32 %v211, 4294901760
    %213 = vmatpush1.msra.mxu0 %v212
    %214 = vmatprep.subr.mxu0 0.0
    %v215 = vand.u32 %v96, 4294901760
    %v216 = vsub.f32 %v96, %v215
    %v217 = vand.u32 %v216, 4294901760
    %v218 = vsub.f32 %v216, %v217
    %v219 = vand.u32 %v218, 4294901760
    %220 = vmatpush1.msra.mxu0 %v219
    %221 = vmatprep.subr.mxu0 0.0
    %v222 = vand.u32 %v97, 4294901760
    %v223 = vsub.f32 %v97, %v222
    %v224 = vand.u32 %v223, 4294901760
    %v225 = vsub.f32 %v223, %v224
    %v226 = vand.u32 %v225, 4294901760
    %227 = vmatpush1.msra.mxu0 %v226
    %228 = vmatprep.subr.mxu0 0.0
    %v229 = vand.u32 %v98, 4294901760
    %v230 = vsub.f32 %v98, %v229
    %v231 = vand.u32 %v230, 4294901760
    %v232 = vsub.f32 %v230, %v231
    %v233 = vand.u32 %v232, 4294901760
    %234 = vmatpush1.msra.mxu0 %v233
    %235 = vmatprep.subr.mxu0 0.0
    %v236 = vand.u32 %v99, 4294901760
    %v237 = vsub.f32 %v99, %v236
    %v238 = vand.u32 %v237, 4294901760
    %v239 = vsub.f32 %v237, %v238
    %v240 = vand.u32 %v239, 4294901760
    %241 = vmatpush1.msra.mxu0 %v240
    %242 = vmatprep.subr.mxu0 0.0
    %v243 = vand.u32 %v100, 4294901760
    %v244 = vsub.f32 %v100, %v243
    %v245 = vand.u32 %v244, 4294901760
    %v246 = vsub.f32 %v244, %v245
    %v247 = vand.u32 %v246, 4294901760
    %248 = vmatpush1.msra.mxu0 %v247
    %249 = vmatprep.subr.mxu0 0.0
    %v250 = vand.u32 %v101, 4294901760
    %v251 = vsub.f32 %v101, %v250
    %v252 = vand.u32 %v251, 4294901760
    %v253 = vsub.f32 %v251, %v252
    %v254 = vand.u32 %v253, 4294901760
    %255 = vmatpush1.msra.mxu0 %v254
    %256 = vmatprep.subr.mxu0 0.0
    %v257 = vand.u32 %v102, 4294901760
    %v258 = vsub.f32 %v102, %v257
    %v259 = vand.u32 %v258, 4294901760
    %v260 = vsub.f32 %v258, %v259
    %v261 = vand.u32 %v260, 4294901760
    %262 = vmatpush1.msra.mxu0 %v261
    %263 = vmatprep.subr.mxu0 0.0
    %v264 = vand.u32 %v103, 4294901760
    %v265 = vsub.f32 %v103, %v264
    %v266 = vand.u32 %v265, 4294901760
    %v267 = vsub.f32 %v265, %v266
    %v268 = vand.u32 %v267, 4294901760
    %269 = vmatpush1.msra.mxu0 %v268
    %270 = vmatprep.subr.mxu0 0.0
    %v271 = vand.u32 %v104, 4294901760
    %v272 = vsub.f32 %v104, %v271
    %v273 = vand.u32 %v272, 4294901760
    %v274 = vsub.f32 %v272, %v273
    %v275 = vand.u32 %v274, 4294901760
    %276 = vmatpush1.msra.mxu0 %v275
    %277 = vmatprep.subr.mxu0 0.0
    %v278 = vand.u32 %v105, 4294901760
    %v279 = vsub.f32 %v105, %v278
    %v280 = vand.u32 %v279, 4294901760
    %v281 = vsub.f32 %v279, %v280
    %v282 = vand.u32 %v281, 4294901760
    %283 = vmatpush1.msra.mxu0 %v282
    %284 = vmatprep.subr.mxu0 0.0
    %v285 = vand.u32 %v106, 4294901760
    %v286 = vsub.f32 %v106, %v285
    %v287 = vand.u32 %v286, 4294901760
    %v288 = vsub.f32 %v286, %v287
    %v289 = vand.u32 %v288, 4294901760
    %290 = vmatpush1.msra.mxu0 %v289
    %291 = vmatprep.subr.mxu0 0.0
    %v292 = vand.u32 %v107, 4294901760
    %v293 = vsub.f32 %v107, %v292
    %v294 = vand.u32 %v293, 4294901760
    %v295 = vsub.f32 %v293, %v294
    %v296 = vand.u32 %v295, 4294901760
    %297 = vmatpush1.msra.mxu0 %v296
    %298 = vmatprep.subr.mxu0 0.0
    %v299 = vand.u32 %v108, 4294901760
    %v300 = vsub.f32 %v108, %v299
    %v301 = vand.u32 %v300, 4294901760
    %v302 = vsub.f32 %v300, %v301
    %v303 = vand.u32 %v302, 4294901760
    %304 = vmatpush1.msra.mxu0 %v303
    %305 = vmatprep.subr.mxu0 0.0
    %v306 = vand.u32 %v109, 4294901760
    %v307 = vsub.f32 %v109, %v306
    %v308 = vand.u32 %v307, 4294901760
    %v309 = vsub.f32 %v307, %v308
    %v310 = vand.u32 %v309, 4294901760
    %311 = vmatpush1.msra.mxu0 %v310
    %312 = vmatprep.subr.mxu0 0.0
    %v313 = vand.u32 %v110, 4294901760
    %v314 = vsub.f32 %v110, %v313
    %v315 = vand.u32 %v314, 4294901760
    %v316 = vsub.f32 %v314, %v315
    %v317 = vand.u32 %v316, 4294901760
    %318 = vmatpush1.msra.mxu0 %v317
    %319 = vmatprep.subr.mxu0 0.0
    %320 = vmatpush1.msra.mxu0 0.0
    %321 = vmatprep.subr.mxu0 0.0
    %322 = vmatpush1.msra.mxu0 0.0
    %323 = vmatprep.subr.mxu0 0.0
    %324 = vmatpush1.msra.mxu0 0.0
    %325 = vmatprep.subr.mxu0 0.0
    %326 = vmatpush1.msra.mxu0 0.0
    %327 = vmatprep.subr.mxu0 0.0
    %328 = vmatpush1.msra.mxu0 0.0
    %329 = vmatprep.subr.mxu0 0.0
    %330 = vmatpush1.msra.mxu0 0.0
    %331 = vmatprep.subr.mxu0 0.0
    %332 = vmatpush1.msra.mxu0 0.0
    %333 = vmatprep.subr.mxu0 0.0
    %334 = vmatpush1.msra.mxu0 0.0
    %335 = vmatprep.subr.mxu0 0.0
    %336 = vmatpush1.msra.mxu0 0.0
    %337 = vmatprep.subr.mxu0 0.0
    %338 = vmatpush1.msra.mxu0 0.0
    %339 = vmatprep.subr.mxu0 0.0
    %340 = vmatpush1.msra.mxu0 0.0
    %341 = vmatprep.subr.mxu0 0.0
    %342 = vmatpush1.msra.mxu0 0.0
    %343 = vmatprep.subr.mxu0 0.0
    %344 = vmatpush1.msra.mxu0 0.0
    %345 = vmatprep.subr.mxu0 0.0
    %346 = vmatpush1.msra.mxu0 0.0
    %347 = vmatprep.subr.mxu0 0.0
    %348 = vmatpush1.msra.mxu0 0.0
    %349 = vmatprep.subr.mxu0 0.0
    %350 = vmatpush1.msra.mxu0 0.0
    %351 = vmatprep.mubr.f32.mxu0 0.0
    %v352 = vand.u32 %v94, 4294901760
    %353 = vmatmul.mubr.f32.gmra.mrb[0].mxu0 %v352
    %v354 = vpop.f32.mrb[0].mxu0
    %v355 = vadd.f32 %v204, %v354
    %v356 = vpop.f32.mrb[0].mxu0
    %357 = vdwg.mxu0
    %358 = vmatprep.subr.mxu0 0.0
    %v359 = vand.u32 %v95, 4294901760
    %v360 = vsub.f32 %v95, %v359
    %361 = vmatpush1.msra.mxu0 %v360
    %362 = vmatprep.subr.mxu0 0.0
    %v363 = vand.u32 %v96, 4294901760
    %v364 = vsub.f32 %v96, %v363
    %365 = vmatpush1.msra.mxu0 %v364
    %366 = vmatprep.subr.mxu0 0.0
    %v367 = vand.u32 %v97, 4294901760
    %v368 = vsub.f32 %v97, %v367
    %369 = vmatpush1.msra.mxu0 %v368
    %370 = vmatprep.subr.mxu0 0.0
    %v371 = vand.u32 %v98, 4294901760
    %v372 = vsub.f32 %v98, %v371
    %373 = vmatpush1.msra.mxu0 %v372
    %374 = vmatprep.subr.mxu0 0.0
    %v375 = vand.u32 %v99, 4294901760
    %v376 = vsub.f32 %v99, %v375
    %377 = vmatpush1.msra.mxu0 %v376
    %378 = vmatprep.subr.mxu0 0.0
    %v379 = vand.u32 %v100, 4294901760
    %v380 = vsub.f32 %v100, %v379
    %381 = vmatpush1.msra.mxu0 %v380
    %382 = vmatprep.subr.mxu0 0.0
    %v383 = vand.u32 %v101, 4294901760
    %v384 = vsub.f32 %v101, %v383
    %385 = vmatpush1.msra.mxu0 %v384
    %386 = vmatprep.subr.mxu0 0.0
    %v387 = vand.u32 %v102, 4294901760
    %v388 = vsub.f32 %v102, %v387
    %389 = vmatpush1.msra.mxu0 %v388
    %390 = vmatprep.subr.mxu0 0.0
    %v391 = vand.u32 %v103, 4294901760
    %v392 = vsub.f32 %v103, %v391
    %393 = vmatpush1.msra.mxu0 %v392
    %394 = vmatprep.subr.mxu0 0.0
    %v395 = vand.u32 %v104, 4294901760
    %v396 = vsub.f32 %v104, %v395
    %397 = vmatpush1.msra.mxu0 %v396
    %398 = vmatprep.subr.mxu0 0.0
    %v399 = vand.u32 %v105, 4294901760
    %v400 = vsub.f32 %v105, %v399
    %401 = vmatpush1.msra.mxu0 %v400
    %402 = vmatprep.subr.mxu0 0.0
    %v403 = vand.u32 %v106, 4294901760
    %v404 = vsub.f32 %v106, %v403
    %405 = vmatpush1.msra.mxu0 %v404
    %406 = vmatprep.subr.mxu0 0.0
    %v407 = vand.u32 %v107, 4294901760
    %v408 = vsub.f32 %v107, %v407
    %409 = vmatpush1.msra.mxu0 %v408
    %410 = vmatprep.subr.mxu0 0.0
    %v411 = vand.u32 %v108, 4294901760
    %v412 = vsub.f32 %v108, %v411
    %413 = vmatpush1.msra.mxu0 %v412
    %414 = vmatprep.subr.mxu0 0.0
    %v415 = vand.u32 %v109, 4294901760
    %v416 = vsub.f32 %v109, %v415
    %417 = vmatpush1.msra.mxu0 %v416
    %418 = vmatprep.subr.mxu0 0.0
    %v419 = vand.u32 %v110, 4294901760
    %v420 = vsub.f32 %v110, %v419
    %421 = vmatpush1.msra.mxu0 %v420
    %422 = vmatprep.subr.mxu0 0.0
    %423 = vmatpush1.msra.mxu0 0.0
    %424 = vmatprep.subr.mxu0 0.0
    %425 = vmatpush1.msra.mxu0 0.0
    %426 = vmatprep.subr.mxu0 0.0
    %427 = vmatpush1.msra.mxu0 0.0
    %428 = vmatprep.subr.mxu0 0.0
    %429 = vmatpush1.msra.mxu0 0.0
    %430 = vmatprep.subr.mxu0 0.0
    %431 = vmatpush1.msra.mxu0 0.0
    %432 = vmatprep.subr.mxu0 0.0
    %433 = vmatpush1.msra.mxu0 0.0
    %434 = vmatprep.subr.mxu0 0.0
    %435 = vmatpush1.msra.mxu0 0.0
    %436 = vmatprep.subr.mxu0 0.0
    %437 = vmatpush1.msra.mxu0 0.0
    %438 = vmatprep.subr.mxu0 0.0
    %439 = vmatpush1.msra.mxu0 0.0
    %440 = vmatprep.subr.mxu0 0.0
    %441 = vmatpush1.msra.mxu0 0.0
    %442 = vmatprep.subr.mxu0 0.0
    %443 = vmatpush1.msra.mxu0 0.0
    %444 = vmatprep.subr.mxu0 0.0
    %445 = vmatpush1.msra.mxu0 0.0
    %446 = vmatprep.subr.mxu0 0.0
    %447 = vmatpush1.msra.mxu0 0.0
    %448 = vmatprep.subr.mxu0 0.0
    %449 = vmatpush1.msra.mxu0 0.0
    %450 = vmatprep.subr.mxu0 0.0
    %451 = vmatpush1.msra.mxu0 0.0
    %452 = vmatprep.subr.mxu0 0.0
    %453 = vmatpush1.msra.mxu0 0.0
    %454 = vmatprep.mubr.f32.mxu0 0.0
    %v455 = vand.u32 %v94, 4294901760
    %v456 = vsub.f32 %v94, %v455
    %457 = vmatmul.mubr.f32.gmra.mrb[0].mxu0 %v456
    %v458 = vpop.f32.mrb[0].mxu0
    %v459 = vadd.f32 %v355, %v458
    %v460 = vpop.f32.mrb[0].mxu0
    %461 = vdwg.mxu0
    %462 = vmatprep.subr.mxu0 0.0
    %v463 = vand.u32 %v95, 4294901760
    %464 = vmatpush1.msra.mxu0 %v463
    %465 = vmatprep.subr.mxu0 0.0
    %v466 = vand.u32 %v96, 4294901760
    %467 = vmatpush1.msra.mxu0 %v466
    %468 = vmatprep.subr.mxu0 0.0
    %v469 = vand.u32 %v97, 4294901760
    %470 = vmatpush1.msra.mxu0 %v469
    %471 = vmatprep.subr.mxu0 0.0
    %v472 = vand.u32 %v98, 4294901760
    %473 = vmatpush1.msra.mxu0 %v472
    %474 = vmatprep.subr.mxu0 0.0
    %v475 = vand.u32 %v99, 4294901760
    %476 = vmatpush1.msra.mxu0 %v475
    %477 = vmatprep.subr.mxu0 0.0
    %v478 = vand.u32 %v100, 4294901760
    %479 = vmatpush1.msra.mxu0 %v478
    %480 = vmatprep.subr.mxu0 0.0
    %v481 = vand.u32 %v101, 4294901760
    %482 = vmatpush1.msra.mxu0 %v481
    %483 = vmatprep.subr.mxu0 0.0
    %v484 = vand.u32 %v102, 4294901760
    %485 = vmatpush1.msra.mxu0 %v484
    %486 = vmatprep.subr.mxu0 0.0
    %v487 = vand.u32 %v103, 4294901760
    %488 = vmatpush1.msra.mxu0 %v487
    %489 = vmatprep.subr.mxu0 0.0
    %v490 = vand.u32 %v104, 4294901760
    %491 = vmatpush1.msra.mxu0 %v490
    %492 = vmatprep.subr.mxu0 0.0
    %v493 = vand.u32 %v105, 4294901760
    %494 = vmatpush1.msra.mxu0 %v493
    %495 = vmatprep.subr.mxu0 0.0
    %v496 = vand.u32 %v106, 4294901760
    %497 = vmatpush1.msra.mxu0 %v496
    %498 = vmatprep.subr.mxu0 0.0
    %v499 = vand.u32 %v107, 4294901760
    %500 = vmatpush1.msra.mxu0 %v499
    %501 = vmatprep.subr.mxu0 0.0
    %v502 = vand.u32 %v108, 4294901760
    %503 = vmatpush1.msra.mxu0 %v502
    %504 = vmatprep.subr.mxu0 0.0
    %v505 = vand.u32 %v109, 4294901760
    %506 = vmatpush1.msra.mxu0 %v505
    %507 = vmatprep.subr.mxu0 0.0
    %v508 = vand.u32 %v110, 4294901760
    %509 = vmatpush1.msra.mxu0 %v508
    %510 = vmatprep.subr.mxu0 0.0
    %511 = vmatpush1.msra.mxu0 0.0
    %512 = vmatprep.subr.mxu0 0.0
    %513 = vmatpush1.msra.mxu0 0.0
    %514 = vmatprep.subr.mxu0 0.0
    %515 = vmatpush1.msra.mxu0 0.0
    %516 = vmatprep.subr.mxu0 0.0
    %517 = vmatpush1.msra.mxu0 0.0
    %518 = vmatprep.subr.mxu0 0.0
    %519 = vmatpush1.msra.mxu0 0.0
    %520 = vmatprep.subr.mxu0 0.0
    %521 = vmatpush1.msra.mxu0 0.0
    %522 = vmatprep.subr.mxu0 0.0
    %523 = vmatpush1.msra.mxu0 0.0
    %524 = vmatprep.subr.mxu0 0.0
    %525 = vmatpush1.msra.mxu0 0.0
    %526 = vmatprep.subr.mxu0 0.0
    %527 = vmatpush1.msra.mxu0 0.0
    %528 = vmatprep.subr.mxu0 0.0
    %529 = vmatpush1.msra.mxu0 0.0
    %530 = vmatprep.subr.mxu0 0.0
    %531 = vmatpush1.msra.mxu0 0.0
    %532 = vmatprep.subr.mxu0 0.0
    %533 = vmatpush1.msra.mxu0 0.0
    %534 = vmatprep.subr.mxu0 0.0
    %535 = vmatpush1.msra.mxu0 0.0
    %536 = vmatprep.subr.mxu0 0.0
    %537 = vmatpush1.msra.mxu0 0.0
    %538 = vmatprep.subr.mxu0 0.0
    %539 = vmatpush1.msra.mxu0 0.0
    %540 = vmatprep.subr.mxu0 0.0
    %541 = vmatpush1.msra.mxu0 0.0
    %542 = vmatprep.mubr.f32.mxu0 0.0
    %v543 = vand.u32 %v94, 4294901760
    %v544 = vsub.f32 %v94, %v543
    %v545 = vand.u32 %v544, 4294901760
    %546 = vmatmul.mubr.f32.gmra.mrb[0].mxu0 %v545
    %v547 = vpop.f32.mrb[0].mxu0
    %v548 = vadd.f32 %v459, %v547
    %v549 = vpop.f32.mrb[0].mxu0
    %550 = vdwg.mxu0
    %551 = vmatprep.subr.mxu0 0.0
    %v552 = vand.u32 %v95, 4294901760
    %v553 = vsub.f32 %v95, %v552
    %v554 = vand.u32 %v553, 4294901760
    %555 = vmatpush1.msra.mxu0 %v554
    %556 = vmatprep.subr.mxu0 0.0
    %v557 = vand.u32 %v96, 4294901760
    %v558 = vsub.f32 %v96, %v557
    %v559 = vand.u32 %v558, 4294901760
    %560 = vmatpush1.msra.mxu0 %v559
    %561 = vmatprep.subr.mxu0 0.0
    %v562 = vand.u32 %v97, 4294901760
    %v563 = vsub.f32 %v97, %v562
    %v564 = vand.u32 %v563, 4294901760
    %565 = vmatpush1.msra.mxu0 %v564
    %566 = vmatprep.subr.mxu0 0.0
    %v567 = vand.u32 %v98, 4294901760
    %v568 = vsub.f32 %v98, %v567
    %v569 = vand.u32 %v568, 4294901760
    %570 = vmatpush1.msra.mxu0 %v569
    %571 = vmatprep.subr.mxu0 0.0
    %v572 = vand.u32 %v99, 4294901760
    %v573 = vsub.f32 %v99, %v572
    %v574 = vand.u32 %v573, 4294901760
    %575 = vmatpush1.msra.mxu0 %v574
    %576 = vmatprep.subr.mxu0 0.0
    %v577 = vand.u32 %v100, 4294901760
    %v578 = vsub.f32 %v100, %v577
    %v579 = vand.u32 %v578, 4294901760
    %580 = vmatpush1.msra.mxu0 %v579
    %581 = vmatprep.subr.mxu0 0.0
    %v582 = vand.u32 %v101, 4294901760
    %v583 = vsub.f32 %v101, %v582
    %v584 = vand.u32 %v583, 4294901760
    %585 = vmatpush1.msra.mxu0 %v584
    %586 = vmatprep.subr.mxu0 0.0
    %v587 = vand.u32 %v102, 4294901760
    %v588 = vsub.f32 %v102, %v587
    %v589 = vand.u32 %v588, 4294901760
    %590 = vmatpush1.msra.mxu0 %v589
    %591 = vmatprep.subr.mxu0 0.0
    %v592 = vand.u32 %v103, 4294901760
    %v593 = vsub.f32 %v103, %v592
    %v594 = vand.u32 %v593, 4294901760
    %595 = vmatpush1.msra.mxu0 %v594
    %596 = vmatprep.subr.mxu0 0.0
    %v597 = vand.u32 %v104, 4294901760
    %v598 = vsub.f32 %v104, %v597
    %v599 = vand.u32 %v598, 4294901760
    %600 = vmatpush1.msra.mxu0 %v599
    %601 = vmatprep.subr.mxu0 0.0
    %v602 = vand.u32 %v105, 4294901760
    %v603 = vsub.f32 %v105, %v602
    %v604 = vand.u32 %v603, 4294901760
    %605 = vmatpush1.msra.mxu0 %v604
    %606 = vmatprep.subr.mxu0 0.0
    %v607 = vand.u32 %v106, 4294901760
    %v608 = vsub.f32 %v106, %v607
    %v609 = vand.u32 %v608, 4294901760
    %610 = vmatpush1.msra.mxu0 %v609
    %611 = vmatprep.subr.mxu0 0.0
    %v612 = vand.u32 %v107, 4294901760
    %v613 = vsub.f32 %v107, %v612
    %v614 = vand.u32 %v613, 4294901760
    %615 = vmatpush1.msra.mxu0 %v614
    %616 = vmatprep.subr.mxu0 0.0
    %v617 = vand.u32 %v108, 4294901760
    %v618 = vsub.f32 %v108, %v617
    %v619 = vand.u32 %v618, 4294901760
    %620 = vmatpush1.msra.mxu0 %v619
    %621 = vmatprep.subr.mxu0 0.0
    %v622 = vand.u32 %v109, 4294901760
    %v623 = vsub.f32 %v109, %v622
    %v624 = vand.u32 %v623, 4294901760
    %625 = vmatpush1.msra.mxu0 %v624
    %626 = vmatprep.subr.mxu0 0.0
    %v627 = vand.u32 %v110, 4294901760
    %v628 = vsub.f32 %v110, %v627
    %v629 = vand.u32 %v628, 4294901760
    %630 = vmatpush1.msra.mxu0 %v629
    %631 = vmatprep.subr.mxu0 0.0
    %632 = vmatpush1.msra.mxu0 0.0
    %633 = vmatprep.subr.mxu0 0.0
    %634 = vmatpush1.msra.mxu0 0.0
    %635 = vmatprep.subr.mxu0 0.0
    %636 = vmatpush1.msra.mxu0 0.0
    %637 = vmatprep.subr.mxu0 0.0
    %638 = vmatpush1.msra.mxu0 0.0
    %639 = vmatprep.subr.mxu0 0.0
    %640 = vmatpush1.msra.mxu0 0.0
    %641 = vmatprep.subr.mxu0 0.0
    %642 = vmatpush1.msra.mxu0 0.0
    %643 = vmatprep.subr.mxu0 0.0
    %644 = vmatpush1.msra.mxu0 0.0
    %645 = vmatprep.subr.mxu0 0.0
    %646 = vmatpush1.msra.mxu0 0.0
    %647 = vmatprep.subr.mxu0 0.0
    %648 = vmatpush1.msra.mxu0 0.0
    %649 = vmatprep.subr.mxu0 0.0
    %650 = vmatpush1.msra.mxu0 0.0
    %651 = vmatprep.subr.mxu0 0.0
    %652 = vmatpush1.msra.mxu0 0.0
    %653 = vmatprep.subr.mxu0 0.0
    %654 = vmatpush1.msra.mxu0 0.0
    %655 = vmatprep.subr.mxu0 0.0
    %656 = vmatpush1.msra.mxu0 0.0
    %657 = vmatprep.subr.mxu0 0.0
    %658 = vmatpush1.msra.mxu0 0.0
    %659 = vmatprep.subr.mxu0 0.0
    %660 = vmatpush1.msra.mxu0 0.0
    %661 = vmatprep.subr.mxu0 0.0
    %662 = vmatpush1.msra.mxu0 0.0
    %663 = vmatprep.mubr.f32.mxu0 0.0
    %v664 = vand.u32 %v94, 4294901760
    %665 = vmatmul.mubr.f32.gmra.mrb[0].mxu0 %v664
    %v666 = vpop.f32.mrb[0].mxu0
    %v667 = vadd.f32 %v548, %v666
    %v668 = vpop.f32.mrb[0].mxu0
    %669 = vdwg.mxu0
    %670 = vmatprep.subr.mxu0 0.0
    %v671 = vand.u32 %v95, 4294901760
    %672 = vmatpush1.msra.mxu0 %v671
    %673 = vmatprep.subr.mxu0 0.0
    %v674 = vand.u32 %v96, 4294901760
    %675 = vmatpush1.msra.mxu0 %v674
    %676 = vmatprep.subr.mxu0 0.0
    %v677 = vand.u32 %v97, 4294901760
    %678 = vmatpush1.msra.mxu0 %v677
    %679 = vmatprep.subr.mxu0 0.0
    %v680 = vand.u32 %v98, 4294901760
    %681 = vmatpush1.msra.mxu0 %v680
    %682 = vmatprep.subr.mxu0 0.0
    %v683 = vand.u32 %v99, 4294901760
    %684 = vmatpush1.msra.mxu0 %v683
    %685 = vmatprep.subr.mxu0 0.0
    %v686 = vand.u32 %v100, 4294901760
    %687 = vmatpush1.msra.mxu0 %v686
    %688 = vmatprep.subr.mxu0 0.0
    %v689 = vand.u32 %v101, 4294901760
    %690 = vmatpush1.msra.mxu0 %v689
    %691 = vmatprep.subr.mxu0 0.0
    %v692 = vand.u32 %v102, 4294901760
    %693 = vmatpush1.msra.mxu0 %v692
    %694 = vmatprep.subr.mxu0 0.0
    %v695 = vand.u32 %v103, 4294901760
    %696 = vmatpush1.msra.mxu0 %v695
    %697 = vmatprep.subr.mxu0 0.0
    %v698 = vand.u32 %v104, 4294901760
    %699 = vmatpush1.msra.mxu0 %v698
    %700 = vmatprep.subr.mxu0 0.0
    %v701 = vand.u32 %v105, 4294901760
    %702 = vmatpush1.msra.mxu0 %v701
    %703 = vmatprep.subr.mxu0 0.0
    %v704 = vand.u32 %v106, 4294901760
    %705 = vmatpush1.msra.mxu0 %v704
    %706 = vmatprep.subr.mxu0 0.0
    %v707 = vand.u32 %v107, 4294901760
    %708 = vmatpush1.msra.mxu0 %v707
    %709 = vmatprep.subr.mxu0 0.0
    %v710 = vand.u32 %v108, 4294901760
    %711 = vmatpush1.msra.mxu0 %v710
    %712 = vmatprep.subr.mxu0 0.0
    %v713 = vand.u32 %v109, 4294901760
    %714 = vmatpush1.msra.mxu0 %v713
    %715 = vmatprep.subr.mxu0 0.0
    %v716 = vand.u32 %v110, 4294901760
    %717 = vmatpush1.msra.mxu0 %v716
    %718 = vmatprep.subr.mxu0 0.0
    %719 = vmatpush1.msra.mxu0 0.0
    %720 = vmatprep.subr.mxu0 0.0
    %721 = vmatpush1.msra.mxu0 0.0
    %722 = vmatprep.subr.mxu0 0.0
    %723 = vmatpush1.msra.mxu0 0.0
    %724 = vmatprep.subr.mxu0 0.0
    %725 = vmatpush1.msra.mxu0 0.0
    %726 = vmatprep.subr.mxu0 0.0
    %727 = vmatpush1.msra.mxu0 0.0
    %728 = vmatprep.subr.mxu0 0.0
    %729 = vmatpush1.msra.mxu0 0.0
    %730 = vmatprep.subr.mxu0 0.0
    %731 = vmatpush1.msra.mxu0 0.0
    %732 = vmatprep.subr.mxu0 0.0
    %733 = vmatpush1.msra.mxu0 0.0
    %734 = vmatprep.subr.mxu0 0.0
    %735 = vmatpush1.msra.mxu0 0.0
    %736 = vmatprep.subr.mxu0 0.0
    %737 = vmatpush1.msra.mxu0 0.0
    %738 = vmatprep.subr.mxu0 0.0
    %739 = vmatpush1.msra.mxu0 0.0
    %740 = vmatprep.subr.mxu0 0.0
    %741 = vmatpush1.msra.mxu0 0.0
    %742 = vmatprep.subr.mxu0 0.0
    %743 = vmatpush1.msra.mxu0 0.0
    %744 = vmatprep.subr.mxu0 0.0
    %745 = vmatpush1.msra.mxu0 0.0
    %746 = vmatprep.subr.mxu0 0.0
    %747 = vmatpush1.msra.mxu0 0.0
    %748 = vmatprep.subr.mxu0 0.0
    %749 = vmatpush1.msra.mxu0 0.0
    %750 = vmatprep.mubr.f32.mxu0 0.0
    %v751 = vand.u32 %v94, 4294901760
    %752 = vmatmul.mubr.f32.gmra.mrb[0].mxu0 %v751
    %v753 = vpop.f32.mrb[0].mxu0
    %v754 = vadd.f32 %v667, %v753
    %v755 = vpop.f32.mrb[0].mxu0
    %756 = vdwg.mxu0
    %v757 = vmax.f32 %v754, 0.0
    %758 = vadd.xlane.f32.xlu0 %v757
    %v759 = vpop.xlane.xlu0 %758
    %v760 = vmul.f32 %v759, 0.03125
    %v761 = vsub.f32 %v757, %v760
    %v762 = vlaneseq
    %v763 = vshrl.u32 %v762, 7
    %v764 = vsub.s32 3, %v763
    %v765 = vrot.slane %v111, %v764
    %v766 = vmul.f32 %v761, %v765
    %v767 = vmul.f32 %v766, %v766
    %768 = vadd.xlane.f32.xlu0 %v767
    %v769 = vpop.xlane.xlu0 %768
    %v770 = vmul.f32 %v769, 0.03125
    %v771 = vadd.f32 %v770, 1e-05
    %v772 = vrsqrt.pop %v771
    %v773 = vmul.f32 %v766, %v772
    %v774 = vlaneseq
    %v775 = vshrl.u32 %v774, 7
    %v776 = vsub.s32 1, %v775
    %v777 = vrot.slane %v111, %v776
    %v778 = vmul.f32 %v773, %v777
    %v779 = vlaneseq
    %v780 = vshrl.u32 %v779, 7
    %v781 = vsub.s32 2, %v780
    %v782 = vrot.slane %v111, %v781
    %v783 = vadd.f32 %v778, %v782
    %v784 = vld [vmem:[#allocation8] sm:$0xff]
    %v785 = vld [vmem:[#allocation8 + $0x8] sm:$0xff]
    %v786 = vld [vmem:[#allocation8 + $0x10] sm:$0xff]
    %v787 = vld [vmem:[#allocation8 + $0x18] sm:$0xff]
    %v788 = vld [vmem:[#allocation8 + $0x20] sm:$0xff]
    %v789 = vld [vmem:[#allocation8 + $0x28] sm:$0xff]
    %v790 = vld [vmem:[#allocation8 + $0x30] sm:$0xff]
    %v791 = vld [vmem:[#allocation8 + $0x38] sm:$0xff]
    %v792 = vld [vmem:[#allocation8 + $0x40] sm:$0xff]
    %v793 = vld [vmem:[#allocation8 + $0x48] sm:$0xff]
    %v794 = vld [vmem:[#allocation8 + $0x50] sm:$0xff]
    %v795 = vld [vmem:[#allocation8 + $0x58] sm:$0xff]
    %v796 = vld [vmem:[#allocation8 + $0x60] sm:$0xff]
    %v797 = vld [vmem:[#allocation8 + $0x68] sm:$0xff]
    %v798 = vld [vmem:[#allocation8 + $0x70] sm:$0xff]
    %v799 = vld [vmem:[#allocation8 + $0x78] sm:$0xff]
    %v800 = vld [vmem:[%s4] sm:$0xff]
    %v801 = vlaneseq
    %v802 = vshrl.u32 %v801, 7
    %v803 = vsub.s32 0, %v802
    %v804 = vrot.slane %v800, %v803
    %805 = vmatprep.subr.mxu0 0.0
    %v806 = vand.u32 %v784, 4294901760
    %807 = vmatpush1.msra.mxu0 %v806
    %808 = vmatprep.subr.mxu0 0.0
    %v809 = vand.u32 %v785, 4294901760
    %810 = vmatpush1.msra.mxu0 %v809
    %811 = vmatprep.subr.mxu0 0.0
    %v812 = vand.u32 %v786, 4294901760
    %813 = vmatpush1.msra.mxu0 %v812
    %814 = vmatprep.subr.mxu0 0.0
    %v815 = vand.u32 %v787, 4294901760
    %816 = vmatpush1.msra.mxu0 %v815
    %817 = vmatprep.subr.mxu0 0.0
    %v818 = vand.u32 %v788, 4294901760
    %819 = vmatpush1.msra.mxu0 %v818
    %820 = vmatprep.subr.mxu0 0.0
    %v821 = vand.u32 %v789, 4294901760
    %822 = vmatpush1.msra.mxu0 %v821
    %823 = vmatprep.subr.mxu0 0.0
    %v824 = vand.u32 %v790, 4294901760
    %825 = vmatpush1.msra.mxu0 %v824
    %826 = vmatprep.subr.mxu0 0.0
    %v827 = vand.u32 %v791, 4294901760
    %828 = vmatpush1.msra.mxu0 %v827
    %829 = vmatprep.subr.mxu0 0.0
    %v830 = vand.u32 %v792, 4294901760
    %831 = vmatpush1.msra.mxu0 %v830
    %832 = vmatprep.subr.mxu0 0.0
    %v833 = vand.u32 %v793, 4294901760
    %834 = vmatpush1.msra.mxu0 %v833
    %835 = vmatprep.subr.mxu0 0.0
    %v836 = vand.u32 %v794, 4294901760
    %837 = vmatpush1.msra.mxu0 %v836
    %838 = vmatprep.subr.mxu0 0.0
    %v839 = vand.u32 %v795, 4294901760
    %840 = vmatpush1.msra.mxu0 %v839
    %841 = vmatprep.subr.mxu0 0.0
    %v842 = vand.u32 %v796, 4294901760
    %843 = vmatpush1.msra.mxu0 %v842
    %844 = vmatprep.subr.mxu0 0.0
    %v845 = vand.u32 %v797, 4294901760
    %846 = vmatpush1.msra.mxu0 %v845
    %847 = vmatprep.subr.mxu0 0.0
    %v848 = vand.u32 %v798, 4294901760
    %849 = vmatpush1.msra.mxu0 %v848
    %850 = vmatprep.subr.mxu0 0.0
    %v851 = vand.u32 %v799, 4294901760
    %852 = vmatpush1.msra.mxu0 %v851
    %853 = vmatprep.subr.mxu0 0.0
    %854 = vmatpush1.msra.mxu0 0.0
    %855 = vmatprep.subr.mxu0 0.0
    %856 = vmatpush1.msra.mxu0 0.0
    %857 = vmatprep.subr.mxu0 0.0
    %858 = vmatpush1.msra.mxu0 0.0
    %859 = vmatprep.subr.mxu0 0.0
    %860 = vmatpush1.msra.mxu0 0.0
    %861 = vmatprep.subr.mxu0 0.0
    %862 = vmatpush1.msra.mxu0 0.0
    %863 = vmatprep.subr.mxu0 0.0
    %864 = vmatpush1.msra.mxu0 0.0
    %865 = vmatprep.subr.mxu0 0.0
    %866 = vmatpush1.msra.mxu0 0.0
    %867 = vmatprep.subr.mxu0 0.0
    %868 = vmatpush1.msra.mxu0 0.0
    %869 = vmatprep.subr.mxu0 0.0
    %870 = vmatpush1.msra.mxu0 0.0
    %871 = vmatprep.subr.mxu0 0.0
    %872 = vmatpush1.msra.mxu0 0.0
    %873 = vmatprep.subr.mxu0 0.0
    %874 = vmatpush1.msra.mxu0 0.0
    %875 = vmatprep.subr.mxu0 0.0
    %876 = vmatpush1.msra.mxu0 0.0
    %877 = vmatprep.subr.mxu0 0.0
    %878 = vmatpush1.msra.mxu0 0.0
    %879 = vmatprep.subr.mxu0 0.0
    %880 = vmatpush1.msra.mxu0 0.0
    %881 = vmatprep.subr.mxu0 0.0
    %882 = vmatpush1.msra.mxu0 0.0
    %883 = vmatprep.subr.mxu0 0.0
    %884 = vmatpush1.msra.mxu0 0.0
    %885 = vmatprep.mubr.f32.mxu0 0.0
    %v886 = vand.u32 %v783, 4294901760
    %v887 = vsub.f32 %v783, %v886
    %v888 = vand.u32 %v887, 4294901760
    %v889 = vsub.f32 %v887, %v888
    %v890 = vand.u32 %v889, 4294901760
    %891 = vmatmul.mubr.f32.gmra.mrb[0].mxu0 %v890
    %v892 = vpop.f32.mrb[0].mxu0
    %v893 = vadd.f32 %v804, %v892
    %v894 = vpop.f32.mrb[0].mxu0
    %895 = vdwg.mxu0
    %896 = vmatprep.subr.mxu0 0.0
    %v897 = vand.u32 %v784, 4294901760
    %v898 = vsub.f32 %v784, %v897
    %v899 = vand.u32 %v898, 4294901760
    %v900 = vsub.f32 %v898, %v899
    %v901 = vand.u32 %v900, 4294901760
    %902 = vmatpush1.msra.mxu0 %v901
    %903 = vmatprep.subr.mxu0 0.0
    %v904 = vand.u32 %v785, 4294901760
    %v905 = vsub.f32 %v785, %v904
    %v906 = vand.u32 %v905, 4294901760
    %v907 = vsub.f32 %v905, %v906
    %v908 = vand.u32 %v907, 4294901760
    %909 = vmatpush1.msra.mxu0 %v908
    %910 = vmatprep.subr.mxu0 0.0
    %v911 = vand.u32 %v786, 4294901760
    %v912 = vsub.f32 %v786, %v911
    %v913 = vand.u32 %v912, 4294901760
    %v914 = vsub.f32 %v912, %v913
    %v915 = vand.u32 %v914, 4294901760
    %916 = vmatpush1.msra.mxu0 %v915
    %917 = vmatprep.subr.mxu0 0.0
    %v918 = vand.u32 %v787, 4294901760
    %v919 = vsub.f32 %v787, %v918
    %v920 = vand.u32 %v919, 4294901760
    %v921 = vsub.f32 %v919, %v920
    %v922 = vand.u32 %v921, 4294901760
    %923 = vmatpush1.msra.mxu0 %v922
    %924 = vmatprep.subr.mxu0 0.0
    %v925 = vand.u32 %v788, 4294901760
    %v926 = vsub.f32 %v788, %v925
    %v927 = vand.u32 %v926, 4294901760
    %v928 = vsub.f32 %v926, %v927
    %v929 = vand.u32 %v928, 4294901760
    %930 = vmatpush1.msra.mxu0 %v929
    %931 = vmatprep.subr.mxu0 0.0
    %v932 = vand.u32 %v789, 4294901760
    %v933 = vsub.f32 %v789, %v932
    %v934 = vand.u32 %v933, 4294901760
    %v935 = vsub.f32 %v933, %v934
    %v936 = vand.u32 %v935, 4294901760
    %937 = vmatpush1.msra.mxu0 %v936
    %938 = vmatprep.subr.mxu0 0.0
    %v939 = vand.u32 %v790, 4294901760
    %v940 = vsub.f32 %v790, %v939
    %v941 = vand.u32 %v940, 4294901760
    %v942 = vsub.f32 %v940, %v941
    %v943 = vand.u32 %v942, 4294901760
    %944 = vmatpush1.msra.mxu0 %v943
    %945 = vmatprep.subr.mxu0 0.0
    %v946 = vand.u32 %v791, 4294901760
    %v947 = vsub.f32 %v791, %v946
    %v948 = vand.u32 %v947, 4294901760
    %v949 = vsub.f32 %v947, %v948
    %v950 = vand.u32 %v949, 4294901760
    %951 = vmatpush1.msra.mxu0 %v950
    %952 = vmatprep.subr.mxu0 0.0
    %v953 = vand.u32 %v792, 4294901760
    %v954 = vsub.f32 %v792, %v953
    %v955 = vand.u32 %v954, 4294901760
    %v956 = vsub.f32 %v954, %v955
    %v957 = vand.u32 %v956, 4294901760
    %958 = vmatpush1.msra.mxu0 %v957
    %959 = vmatprep.subr.mxu0 0.0
    %v960 = vand.u32 %v793, 4294901760
    %v961 = vsub.f32 %v793, %v960
    %v962 = vand.u32 %v961, 4294901760
    %v963 = vsub.f32 %v961, %v962
    %v964 = vand.u32 %v963, 4294901760
    %965 = vmatpush1.msra.mxu0 %v964
    %966 = vmatprep.subr.mxu0 0.0
    %v967 = vand.u32 %v794, 4294901760
    %v968 = vsub.f32 %v794, %v967
    %v969 = vand.u32 %v968, 4294901760
    %v970 = vsub.f32 %v968, %v969
    %v971 = vand.u32 %v970, 4294901760
    %972 = vmatpush1.msra.mxu0 %v971
    %973 = vmatprep.subr.mxu0 0.0
    %v974 = vand.u32 %v795, 4294901760
    %v975 = vsub.f32 %v795, %v974
    %v976 = vand.u32 %v975, 4294901760
    %v977 = vsub.f32 %v975, %v976
    %v978 = vand.u32 %v977, 4294901760
    %979 = vmatpush1.msra.mxu0 %v978
    %980 = vmatprep.subr.mxu0 0.0
    %v981 = vand.u32 %v796, 4294901760
    %v982 = vsub.f32 %v796, %v981
    %v983 = vand.u32 %v982, 4294901760
    %v984 = vsub.f32 %v982, %v983
    %v985 = vand.u32 %v984, 4294901760
    %986 = vmatpush1.msra.mxu0 %v985
    %987 = vmatprep.subr.mxu0 0.0
    %v988 = vand.u32 %v797, 4294901760
    %v989 = vsub.f32 %v797, %v988
    %v990 = vand.u32 %v989, 4294901760
    %v991 = vsub.f32 %v989, %v990
    %v992 = vand.u32 %v991, 4294901760
    %993 = vmatpush1.msra.mxu0 %v992
    %994 = vmatprep.subr.mxu0 0.0
    %v995 = vand.u32 %v798, 4294901760
    %v996 = vsub.f32 %v798, %v995
    %v997 = vand.u32 %v996, 4294901760
    %v998 = vsub.f32 %v996, %v997
    %v999 = vand.u32 %v998, 4294901760
    %1000 = vmatpush1.msra.mxu0 %v999
    %1001 = vmatprep.subr.mxu0 0.0
    %v1002 = vand.u32 %v799, 4294901760
    %v1003 = vsub.f32 %v799, %v1002
    %v1004 = vand.u32 %v1003, 4294901760
    %v1005 = vsub.f32 %v1003, %v1004
    %v1006 = vand.u32 %v1005, 4294901760
    %1007 = vmatpush1.msra.mxu0 %v1006
    %1008 = vmatprep.subr.mxu0 0.0
    %1009 = vmatpush1.msra.mxu0 0.0
    %1010 = vmatprep.subr.mxu0 0.0
    %1011 = vmatpush1.msra.mxu0 0.0
    %1012 = vmatprep.subr.mxu0 0.0
    %1013 = vmatpush1.msra.mxu0 0.0
    %1014 = vmatprep.subr.mxu0 0.0
    %1015 = vmatpush1.msra.mxu0 0.0
    %1016 = vmatprep.subr.mxu0 0.0
    %1017 = vmatpush1.msra.mxu0 0.0
    %1018 = vmatprep.subr.mxu0 0.0
    %1019 = vmatpush1.msra.mxu0 0.0
    %1020 = vmatprep.subr.mxu0 0.0
    %1021 = vmatpush1.msra.mxu0 0.0
    %1022 = vmatprep.subr.mxu0 0.0
    %1023 = vmatpush1.msra.mxu0 0.0
    %1024 = vmatprep.subr.mxu0 0.0
    %1025 = vmatpush1.msra.mxu0 0.0
    %1026 = vmatprep.subr.mxu0 0.0
    %1027 = vmatpush1.msra.mxu0 0.0
    %1028 = vmatprep.subr.mxu0 0.0
    %1029 = vmatpush1.msra.mxu0 0.0
    %1030 = vmatprep.subr.mxu0 0.0
    %1031 = vmatpush1.msra.mxu0 0.0
    %1032 = vmatprep.subr.mxu0 0.0
    %1033 = vmatpush1.msra.mxu0 0.0
    %1034 = vmatprep.subr.mxu0 0.0
    %1035 = vmatpush1.msra.mxu0 0.0
    %1036 = vmatprep.subr.mxu0 0.0
    %1037 = vmatpush1.msra.mxu0 0.0
    %1038 = vmatprep.subr.mxu0 0.0
    %1039 = vmatpush1.msra.mxu0 0.0
    %1040 = vmatprep.mubr.f32.mxu0 0.0
    %v1041 = vand.u32 %v783, 4294901760
    %1042 = vmatmul.mubr.f32.gmra.mrb[0].mxu0 %v1041
    %v1043 = vpop.f32.mrb[0].mxu0
    %v1044 = vadd.f32 %v893, %v1043
    %v1045 = vpop.f32.mrb[0].mxu0
    %1046 = vdwg.mxu0
    %1047 = vmatprep.subr.mxu0 0.0
    %v1048 = vand.u32 %v784, 4294901760
    %v1049 = vsub.f32 %v784, %v1048
    %1050 = vmatpush1.msra.mxu0 %v1049
    %1051 = vmatprep.subr.mxu0 0.0
    %v1052 = vand.u32 %v785, 4294901760
    %v1053 = vsub.f32 %v785, %v1052
    %1054 = vmatpush1.msra.mxu0 %v1053
    %1055 = vmatprep.subr.mxu0 0.0
    %v1056 = vand.u32 %v786, 4294901760
    %v1057 = vsub.f32 %v786, %v1056
    %1058 = vmatpush1.msra.mxu0 %v1057
    %1059 = vmatprep.subr.mxu0 0.0
    %v1060 = vand.u32 %v787, 4294901760
    %v1061 = vsub.f32 %v787, %v1060
    %1062 = vmatpush1.msra.mxu0 %v1061
    %1063 = vmatprep.subr.mxu0 0.0
    %v1064 = vand.u32 %v788, 4294901760
    %v1065 = vsub.f32 %v788, %v1064
    %1066 = vmatpush1.msra.mxu0 %v1065
    %1067 = vmatprep.subr.mxu0 0.0
    %v1068 = vand.u32 %v789, 4294901760
    %v1069 = vsub.f32 %v789, %v1068
    %1070 = vmatpush1.msra.mxu0 %v1069
    %1071 = vmatprep.subr.mxu0 0.0
    %v1072 = vand.u32 %v790, 4294901760
    %v1073 = vsub.f32 %v790, %v1072
    %1074 = vmatpush1.msra.mxu0 %v1073
    %1075 = vmatprep.subr.mxu0 0.0
    %v1076 = vand.u32 %v791, 4294901760
    %v1077 = vsub.f32 %v791, %v1076
    %1078 = vmatpush1.msra.mxu0 %v1077
    %1079 = vmatprep.subr.mxu0 0.0
    %v1080 = vand.u32 %v792, 4294901760
    %v1081 = vsub.f32 %v792, %v1080
    %1082 = vmatpush1.msra.mxu0 %v1081
    %1083 = vmatprep.subr.mxu0 0.0
    %v1084 = vand.u32 %v793, 4294901760
    %v1085 = vsub.f32 %v793, %v1084
    %1086 = vmatpush1.msra.mxu0 %v1085
    %1087 = vmatprep.subr.mxu0 0.0
    %v1088 = vand.u32 %v794, 4294901760
    %v1089 = vsub.f32 %v794, %v1088
    %1090 = vmatpush1.msra.mxu0 %v1089
    %1091 = vmatprep.subr.mxu0 0.0
    %v1092 = vand.u32 %v795, 4294901760
    %v1093 = vsub.f32 %v795, %v1092
    %1094 = vmatpush1.msra.mxu0 %v1093
    %1095 = vmatprep.subr.mxu0 0.0
    %v1096 = vand.u32 %v796, 4294901760
    %v1097 = vsub.f32 %v796, %v1096
    %1098 = vmatpush1.msra.mxu0 %v1097
    %1099 = vmatprep.subr.mxu0 0.0
    %v1100 = vand.u32 %v797, 4294901760
    %v1101 = vsub.f32 %v797, %v1100
    %1102 = vmatpush1.msra.mxu0 %v1101
    %1103 = vmatprep.subr.mxu0 0.0
    %v1104 = vand.u32 %v798, 4294901760
    %v1105 = vsub.f32 %v798, %v1104
    %1106 = vmatpush1.msra.mxu0 %v1105
    %1107 = vmatprep.subr.mxu0 0.0
    %v1108 = vand.u32 %v799, 4294901760
    %v1109 = vsub.f32 %v799, %v1108
    %1110 = vmatpush1.msra.mxu0 %v1109
    %1111 = vmatprep.subr.mxu0 0.0
    %1112 = vmatpush1.msra.mxu0 0.0
    %1113 = vmatprep.subr.mxu0 0.0
    %1114 = vmatpush1.msra.mxu0 0.0
    %1115 = vmatprep.subr.mxu0 0.0
    %1116 = vmatpush1.msra.mxu0 0.0
    %1117 = vmatprep.subr.mxu0 0.0
    %1118 = vmatpush1.msra.mxu0 0.0
    %1119 = vmatprep.subr.mxu0 0.0
    %1120 = vmatpush1.msra.mxu0 0.0
    %1121 = vmatprep.subr.mxu0 0.0
    %1122 = vmatpush1.msra.mxu0 0.0
    %1123 = vmatprep.subr.mxu0 0.0
    %1124 = vmatpush1.msra.mxu0 0.0
    %1125 = vmatprep.subr.mxu0 0.0
    %1126 = vmatpush1.msra.mxu0 0.0
    %1127 = vmatprep.subr.mxu0 0.0
    %1128 = vmatpush1.msra.mxu0 0.0
    %1129 = vmatprep.subr.mxu0 0.0
    %1130 = vmatpush1.msra.mxu0 0.0
    %1131 = vmatprep.subr.mxu0 0.0
    %1132 = vmatpush1.msra.mxu0 0.0
    %1133 = vmatprep.subr.mxu0 0.0
    %1134 = vmatpush1.msra.mxu0 0.0
    %1135 = vmatprep.subr.mxu0 0.0
    %1136 = vmatpush1.msra.mxu0 0.0
    %1137 = vmatprep.subr.mxu0 0.0
    %1138 = vmatpush1.msra.mxu0 0.0
    %1139 = vmatprep.subr.mxu0 0.0
    %1140 = vmatpush1.msra.mxu0 0.0
    %1141 = vmatprep.subr.mxu0 0.0
    %1142 = vmatpush1.msra.mxu0 0.0
    %1143 = vmatprep.mubr.f32.mxu0 0.0
    %v1144 = vand.u32 %v783, 4294901760
    %v1145 = vsub.f32 %v783, %v1144
    %1146 = vmatmul.mubr.f32.gmra.mrb[0].mxu0 %v1145
    %v1147 = vpop.f32.mrb[0].mxu0
    %v1148 = vadd.f32 %v1044, %v1147
    %v1149 = vpop.f32.mrb[0].mxu0
    %1150 = vdwg.mxu0
    %1151 = vmatprep.subr.mxu0 0.0
    %v1152 = vand.u32 %v784, 4294901760
    %1153 = vmatpush1.msra.mxu0 %v1152
    %1154 = vmatprep.subr.mxu0 0.0
    %v1155 = vand.u32 %v785, 4294901760
    %1156 = vmatpush1.msra.mxu0 %v1155
    %1157 = vmatprep.subr.mxu0 0.0
    %v1158 = vand.u32 %v786, 4294901760
    %1159 = vmatpush1.msra.mxu0 %v1158
    %1160 = vmatprep.subr.mxu0 0.0
    %v1161 = vand.u32 %v787, 4294901760
    %1162 = vmatpush1.msra.mxu0 %v1161
    %1163 = vmatprep.subr.mxu0 0.0
    %v1164 = vand.u32 %v788, 4294901760
    %1165 = vmatpush1.msra.mxu0 %v1164
    %1166 = vmatprep.subr.mxu0 0.0
    %v1167 = vand.u32 %v789, 4294901760
    %1168 = vmatpush1.msra.mxu0 %v1167
    %1169 = vmatprep.subr.mxu0 0.0
    %v1170 = vand.u32 %v790, 4294901760
    %1171 = vmatpush1.msra.mxu0 %v1170
    %1172 = vmatprep.subr.mxu0 0.0
    %v1173 = vand.u32 %v791, 4294901760
    %1174 = vmatpush1.msra.mxu0 %v1173
    %1175 = vmatprep.subr.mxu0 0.0
    %v1176 = vand.u32 %v792, 4294901760
    %1177 = vmatpush1.msra.mxu0 %v1176
    %1178 = vmatprep.subr.mxu0 0.0
    %v1179 = vand.u32 %v793, 4294901760
    %1180 = vmatpush1.msra.mxu0 %v1179
    %1181 = vmatprep.subr.mxu0 0.0
    %v1182 = vand.u32 %v794, 4294901760
    %1183 = vmatpush1.msra.mxu0 %v1182
    %1184 = vmatprep.subr.mxu0 0.0
    %v1185 = vand.u32 %v795, 4294901760
    %1186 = vmatpush1.msra.mxu0 %v1185
    %1187 = vmatprep.subr.mxu0 0.0
    %v1188 = vand.u32 %v796, 4294901760
    %1189 = vmatpush1.msra.mxu0 %v1188
    %1190 = vmatprep.subr.mxu0 0.0
    %v1191 = vand.u32 %v797, 4294901760
    %1192 = vmatpush1.msra.mxu0 %v1191
    %1193 = vmatprep.subr.mxu0 0.0
    %v1194 = vand.u32 %v798, 4294901760
    %1195 = vmatpush1.msra.mxu0 %v1194
    %1196 = vmatprep.subr.mxu0 0.0
    %v1197 = vand.u32 %v799, 4294901760
    %1198 = vmatpush1.msra.mxu0 %v1197
    %1199 = vmatprep.subr.mxu0 0.0
    %1200 = vmatpush1.msra.mxu0 0.0
    %1201 = vmatprep.subr.mxu0 0.0
    %1202 = vmatpush1.msra.mxu0 0.0
    %1203 = vmatprep.subr.mxu0 0.0
    %1204 = vmatpush1.msra.mxu0 0.0
    %1205 = vmatprep.subr.mxu0 0.0
    %1206 = vmatpush1.msra.mxu0 0.0
    %1207 = vmatprep.subr.mxu0 0.0
    %1208 = vmatpush1.msra.mxu0 0.0
    %1209 = vmatprep.subr.mxu0 0.0
    %1210 = vmatpush1.msra.mxu0 0.0
    %1211 = vmatprep.subr.mxu0 0.0
    %1212 = vmatpush1.msra.mxu0 0.0
    %1213 = vmatprep.subr.mxu0 0.0
    %1214 = vmatpush1.msra.mxu0 0.0
    %1215 = vmatprep.subr.mxu0 0.0
    %1216 = vmatpush1.msra.mxu0 0.0
    %1217 = vmatprep.subr.mxu0 0.0
    %1218 = vmatpush1.msra.mxu0 0.0
    %1219 = vmatprep.subr.mxu0 0.0
    %1220 = vmatpush1.msra.mxu0 0.0
    %1221 = vmatprep.subr.mxu0 0.0
    %1222 = vmatpush1.msra.mxu0 0.0
    %1223 = vmatprep.subr.mxu0 0.0
    %1224 = vmatpush1.msra.mxu0 0.0
    %1225 = vmatprep.subr.mxu0 0.0
    %1226 = vmatpush1.msra.mxu0 0.0
    %1227 = vmatprep.subr.mxu0 0.0
    %1228 = vmatpush1.msra.mxu0 0.0
    %1229 = vmatprep.subr.mxu0 0.0
    %1230 = vmatpush1.msra.mxu0 0.0
    %1231 = vmatprep.mubr.f32.mxu0 0.0
    %v1232 = vand.u32 %v783, 4294901760
    %v1233 = vsub.f32 %v783, %v1232
    %v1234 = vand.u32 %v1233, 4294901760
    %1235 = vmatmul.mubr.f32.gmra.mrb[0].mxu0 %v1234
    %v1236 = vpop.f32.mrb[0].mxu0
    %v1237 = vadd.f32 %v1148, %v1236
    %v1238 = vpop.f32.mrb[0].mxu0
    %1239 = vdwg.mxu0
    %1240 = vmatprep.subr.mxu0 0.0
    %v1241 = vand.u32 %v784, 4294901760
    %v1242 = vsub.f32 %v784, %v1241
    %v1243 = vand.u32 %v1242, 4294901760
    %1244 = vmatpush1.msra.mxu0 %v1243
    %1245 = vmatprep.subr.mxu0 0.0
    %v1246 = vand.u32 %v785, 4294901760
    %v1247 = vsub.f32 %v785, %v1246
    %v1248 = vand.u32 %v1247, 4294901760
    %1249 = vmatpush1.msra.mxu0 %v1248
    %1250 = vmatprep.subr.mxu0 0.0
    %v1251 = vand.u32 %v786, 4294901760
    %v1252 = vsub.f32 %v786, %v1251
    %v1253 = vand.u32 %v1252, 4294901760
    %1254 = vmatpush1.msra.mxu0 %v1253
    %1255 = vmatprep.subr.mxu0 0.0
    %v1256 = vand.u32 %v787, 4294901760
    %v1257 = vsub.f32 %v787, %v1256
    %v1258 = vand.u32 %v1257, 4294901760
    %1259 = vmatpush1.msra.mxu0 %v1258
    %1260 = vmatprep.subr.mxu0 0.0
    %v1261 = vand.u32 %v788, 4294901760
    %v1262 = vsub.f32 %v788, %v1261
    %v1263 = vand.u32 %v1262, 4294901760
    %1264 = vmatpush1.msra.mxu0 %v1263
    %1265 = vmatprep.subr.mxu0 0.0
    %v1266 = vand.u32 %v789, 4294901760
    %v1267 = vsub.f32 %v789, %v1266
    %v1268 = vand.u32 %v1267, 4294901760
    %1269 = vmatpush1.msra.mxu0 %v1268
    %1270 = vmatprep.subr.mxu0 0.0
    %v1271 = vand.u32 %v790, 4294901760
    %v1272 = vsub.f32 %v790, %v1271
    %v1273 = vand.u32 %v1272, 4294901760
    %1274 = vmatpush1.msra.mxu0 %v1273
    %1275 = vmatprep.subr.mxu0 0.0
    %v1276 = vand.u32 %v791, 4294901760
    %v1277 = vsub.f32 %v791, %v1276
    %v1278 = vand.u32 %v1277, 4294901760
    %1279 = vmatpush1.msra.mxu0 %v1278
    %1280 = vmatprep.subr.mxu0 0.0
    %v1281 = vand.u32 %v792, 4294901760
    %v1282 = vsub.f32 %v792, %v1281
    %v1283 = vand.u32 %v1282, 4294901760
    %1284 = vmatpush1.msra.mxu0 %v1283
    %1285 = vmatprep.subr.mxu0 0.0
    %v1286 = vand.u32 %v793, 4294901760
    %v1287 = vsub.f32 %v793, %v1286
    %v1288 = vand.u32 %v1287, 4294901760
    %1289 = vmatpush1.msra.mxu0 %v1288
    %1290 = vmatprep.subr.mxu0 0.0
    %v1291 = vand.u32 %v794, 4294901760
    %v1292 = vsub.f32 %v794, %v1291
    %v1293 = vand.u32 %v1292, 4294901760
    %1294 = vmatpush1.msra.mxu0 %v1293
    %1295 = vmatprep.subr.mxu0 0.0
    %v1296 = vand.u32 %v795, 4294901760
    %v1297 = vsub.f32 %v795, %v1296
    %v1298 = vand.u32 %v1297, 4294901760
    %1299 = vmatpush1.msra.mxu0 %v1298
    %1300 = vmatprep.subr.mxu0 0.0
    %v1301 = vand.u32 %v796, 4294901760
    %v1302 = vsub.f32 %v796, %v1301
    %v1303 = vand.u32 %v1302, 4294901760
    %1304 = vmatpush1.msra.mxu0 %v1303
    %1305 = vmatprep.subr.mxu0 0.0
    %v1306 = vand.u32 %v797, 4294901760
    %v1307 = vsub.f32 %v797, %v1306
    %v1308 = vand.u32 %v1307, 4294901760
    %1309 = vmatpush1.msra.mxu0 %v1308
    %1310 = vmatprep.subr.mxu0 0.0
    %v1311 = vand.u32 %v798, 4294901760
    %v1312 = vsub.f32 %v798, %v1311
    %v1313 = vand.u32 %v1312, 4294901760
    %1314 = vmatpush1.msra.mxu0 %v1313
    %1315 = vmatprep.subr.mxu0 0.0
    %v1316 = vand.u32 %v799, 4294901760
    %v1317 = vsub.f32 %v799, %v1316
    %v1318 = vand.u32 %v1317, 4294901760
    %1319 = vmatpush1.msra.mxu0 %v1318
    %1320 = vmatprep.subr.mxu0 0.0
    %1321 = vmatpush1.msra.mxu0 0.0
    %1322 = vmatprep.subr.mxu0 0.0
    %1323 = vmatpush1.msra.mxu0 0.0
    %1324 = vmatprep.subr.mxu0 0.0
    %1325 = vmatpush1.msra.mxu0 0.0
    %1326 = vmatprep.subr.mxu0 0.0
    %1327 = vmatpush1.msra.mxu0 0.0
    %1328 = vmatprep.subr.mxu0 0.0
    %1329 = vmatpush1.msra.mxu0 0.0
    %1330 = vmatprep.subr.mxu0 0.0
    %1331 = vmatpush1.msra.mxu0 0.0
    %1332 = vmatprep.subr.mxu0 0.0
    %1333 = vmatpush1.msra.mxu0 0.0
    %1334 = vmatprep.subr.mxu0 0.0
    %1335 = vmatpush1.msra.mxu0 0.0
    %1336 = vmatprep.subr.mxu0 0.0
    %1337 = vmatpush1.msra.mxu0 0.0
    %1338 = vmatprep.subr.mxu0 0.0
    %1339 = vmatpush1.msra.mxu0 0.0
    %1340 = vmatprep.subr.mxu0 0.0
    %1341 = vmatpush1.msra.mxu0 0.0
    %1342 = vmatprep.subr.mxu0 0.0
    %1343 = vmatpush1.msra.mxu0 0.0
    %1344 = vmatprep.subr.mxu0 0.0
    %1345 = vmatpush1.msra.mxu0 0.0
    %1346 = vmatprep.subr.mxu0 0.0
    %1347 = vmatpush1.msra.mxu0 0.0
    %1348 = vmatprep.subr.mxu0 0.0
    %1349 = vmatpush1.msra.mxu0 0.0
    %1350 = vmatprep.subr.mxu0 0.0
    %1351 = vmatpush1.msra.mxu0 0.0
    %1352 = vmatprep.mubr.f32.mxu0 0.0
    %v1353 = vand.u32 %v783, 4294901760
    %1354 = vmatmul.mubr.f32.gmra.mrb[0].mxu0 %v1353
    %v1355 = vpop.f32.mrb[0].mxu0
    %v1356 = vadd.f32 %v1237, %v1355
    %v1357 = vpop.f32.mrb[0].mxu0
    %1358 = vdwg.mxu0
    %1359 = vmatprep.subr.mxu0 0.0
    %v1360 = vand.u32 %v784, 4294901760
    %1361 = vmatpush1.msra.mxu0 %v1360
    %1362 = vmatprep.subr.mxu0 0.0
    %v1363 = vand.u32 %v785, 4294901760
    %1364 = vmatpush1.msra.mxu0 %v1363
    %1365 = vmatprep.subr.mxu0 0.0
    %v1366 = vand.u32 %v786, 4294901760
    %1367 = vmatpush1.msra.mxu0 %v1366
    %1368 = vmatprep.subr.mxu0 0.0
    %v1369 = vand.u32 %v787, 4294901760
    %1370 = vmatpush1.msra.mxu0 %v1369
    %1371 = vmatprep.subr.mxu0 0.0
    %v1372 = vand.u32 %v788, 4294901760
    %1373 = vmatpush1.msra.mxu0 %v1372
    %1374 = vmatprep.subr.mxu0 0.0
    %v1375 = vand.u32 %v789, 4294901760
    %1376 = vmatpush1.msra.mxu0 %v1375
    %1377 = vmatprep.subr.mxu0 0.0
    %v1378 = vand.u32 %v790, 4294901760
    %1379 = vmatpush1.msra.mxu0 %v1378
    %1380 = vmatprep.subr.mxu0 0.0
    %v1381 = vand.u32 %v791, 4294901760
    %1382 = vmatpush1.msra.mxu0 %v1381
    %1383 = vmatprep.subr.mxu0 0.0
    %v1384 = vand.u32 %v792, 4294901760
    %1385 = vmatpush1.msra.mxu0 %v1384
    %1386 = vmatprep.subr.mxu0 0.0
    %v1387 = vand.u32 %v793, 4294901760
    %1388 = vmatpush1.msra.mxu0 %v1387
    %1389 = vmatprep.subr.mxu0 0.0
    %v1390 = vand.u32 %v794, 4294901760
    %1391 = vmatpush1.msra.mxu0 %v1390
    %1392 = vmatprep.subr.mxu0 0.0
    %v1393 = vand.u32 %v795, 4294901760
    %1394 = vmatpush1.msra.mxu0 %v1393
    %1395 = vmatprep.subr.mxu0 0.0
    %v1396 = vand.u32 %v796, 4294901760
    %1397 = vmatpush1.msra.mxu0 %v1396
    %1398 = vmatprep.subr.mxu0 0.0
    %v1399 = vand.u32 %v797, 4294901760
    %1400 = vmatpush1.msra.mxu0 %v1399
    %1401 = vmatprep.subr.mxu0 0.0
    %v1402 = vand.u32 %v798, 4294901760
    %1403 = vmatpush1.msra.mxu0 %v1402
    %1404 = vmatprep.subr.mxu0 0.0
    %v1405 = vand.u32 %v799, 4294901760
    %1406 = vmatpush1.msra.mxu0 %v1405
    %1407 = vmatprep.subr.mxu0 0.0
    %1408 = vmatpush1.msra.mxu0 0.0
    %1409 = vmatprep.subr.mxu0 0.0
    %1410 = vmatpush1.msra.mxu0 0.0
    %1411 = vmatprep.subr.mxu0 0.0
    %1412 = vmatpush1.msra.mxu0 0.0
    %1413 = vmatprep.subr.mxu0 0.0
    %1414 = vmatpush1.msra.mxu0 0.0
    %1415 = vmatprep.subr.mxu0 0.0
    %1416 = vmatpush1.msra.mxu0 0.0
    %1417 = vmatprep.subr.mxu0 0.0
    %1418 = vmatpush1.msra.mxu0 0.0
    %1419 = vmatprep.subr.mxu0 0.0
    %1420 = vmatpush1.msra.mxu0 0.0
    %1421 = vmatprep.subr.mxu0 0.0
    %1422 = vmatpush1.msra.mxu0 0.0
    %1423 = vmatprep.subr.mxu0 0.0
    %1424 = vmatpush1.msra.mxu0 0.0
    %1425 = vmatprep.subr.mxu0 0.0
    %1426 = vmatpush1.msra.mxu0 0.0
    %1427 = vmatprep.subr.mxu0 0.0
    %1428 = vmatpush1.msra.mxu0 0.0
    %1429 = vmatprep.subr.mxu0 0.0
    %1430 = vmatpush1.msra.mxu0 0.0
    %1431 = vmatprep.subr.mxu0 0.0
    %1432 = vmatpush1.msra.mxu0 0.0
    %1433 = vmatprep.subr.mxu0 0.0
    %1434 = vmatpush1.msra.mxu0 0.0
    %1435 = vmatprep.subr.mxu0 0.0
    %1436 = vmatpush1.msra.mxu0 0.0
    %1437 = vmatprep.subr.mxu0 0.0
    %1438 = vmatpush1.msra.mxu0 0.0
    %1439 = vmatprep.mubr.f32.mxu0 0.0
    %v1440 = vand.u32 %v783, 4294901760
    %1441 = vmatmul.mubr.f32.gmra.mrb[0].mxu0 %v1440
    %v1442 = vpop.f32.mrb[0].mxu0
    %v1443 = vadd.f32 %v1356, %v1442
    %v1444 = vpop.f32.mrb[0].mxu0
    %1445 = vdwg.mxu0
    %v1446 = vmax.f32 %v1443, 0.0
    %1447 = vadd.xlane.f32.xlu0 %v1446
    %v1448 = vpop.xlane.xlu0 %1447
    %v1449 = vmul.f32 %v1448, 0.03125
    %v1450 = vsub.f32 %v1446, %v1449
    %v1451 = vlaneseq
    %v1452 = vshrl.u32 %v1451, 7
    %v1453 = vsub.s32 3, %v1452
    %v1454 = vrot.slane %v800, %v1453
    %v1455 = vmul.f32 %v1450, %v1454
    %v1456 = vmul.f32 %v1455, %v1455
    %1457 = vadd.xlane.f32.xlu0 %v1456
    %v1458 = vpop.xlane.xlu0 %1457
    %v1459 = vmul.f32 %v1458, 0.03125
    %v1460 = vadd.f32 %v1459, 1e-05
    %v1461 = vrsqrt.pop %v1460
    %v1462 = vmul.f32 %v1455, %v1461
    %v1463 = vlaneseq
    %v1464 = vshrl.u32 %v1463, 7
    %v1465 = vsub.s32 1, %v1464
    %v1466 = vrot.slane %v800, %v1465
    %v1467 = vmul.f32 %v1462, %v1466
    %v1468 = vlaneseq
    %v1469 = vshrl.u32 %v1468, 7
    %v1470 = vsub.s32 2, %v1469
    %v1471 = vrot.slane %v800, %v1470
    %v1472 = vadd.f32 %v1467, %v1471
    %1473 = vst [vmem:[#allocation11] sm:$0xff] %v1472
    %v1474 = vld [vmem:[#allocation10] sm:$0xff]
    %v1475 = vld [vmem:[#allocation10 + $0x8] sm:$0xff]
    %v1476 = vld [vmem:[#allocation10 + $0x10] sm:$0xff]
    %v1477 = vld [vmem:[#allocation10 + $0x18] sm:$0xff]
    %v1478 = vld [vmem:[#allocation10 + $0x20] sm:$0xff]
    %v1479 = vld [vmem:[#allocation10 + $0x28] sm:$0xff]
    %v1480 = vld [vmem:[#allocation10 + $0x30] sm:$0xff]
    %v1481 = vld [vmem:[#allocation10 + $0x38] sm:$0xff]
    %v1482 = vld [vmem:[#allocation10 + $0x40] sm:$0xff]
    %v1483 = vld [vmem:[#allocation10 + $0x48] sm:$0xff]
    %v1484 = vld [vmem:[#allocation10 + $0x50] sm:$0xff]
    %v1485 = vld [vmem:[#allocation10 + $0x58] sm:$0xff]
    %v1486 = vld [vmem:[#allocation10 + $0x60] sm:$0xff]
    %v1487 = vld [vmem:[#allocation10 + $0x68] sm:$0xff]
    %v1488 = vld [vmem:[#allocation10 + $0x70] sm:$0xff]
    %v1489 = vld [vmem:[#allocation10 + $0x78] sm:$0xff]
    %v1490 = vld [vmem:[%s6] sm:$0xff]
    %v1491 = vlaneseq
    %v1492 = vshrl.u32 %v1491, 7
    %v1493 = vsub.s32 0, %v1492
    %v1494 = vrot.slane %v1490, %v1493
    %1495 = vmatprep.subr.mxu0 0.0
    %v1496 = vand.u32 %v1474, 4294901760
    %1497 = vmatpush1.msra.mxu0 %v1496
    %1498 = vmatprep.subr.mxu0 0.0
    %v1499 = vand.u32 %v1475, 4294901760
    %1500 = vmatpush1.msra.mxu0 %v1499
    %1501 = vmatprep.subr.mxu0 0.0
    %v1502 = vand.u32 %v1476, 4294901760
    %1503 = vmatpush1.msra.mxu0 %v1502
    %1504 = vmatprep.subr.mxu0 0.0
    %v1505 = vand.u32 %v1477, 4294901760
    %1506 = vmatpush1.msra.mxu0 %v1505
    %1507 = vmatprep.subr.mxu0 0.0
    %v1508 = vand.u32 %v1478, 4294901760
    %1509 = vmatpush1.msra.mxu0 %v1508
    %1510 = vmatprep.subr.mxu0 0.0
    %v1511 = vand.u32 %v1479, 4294901760
    %1512 = vmatpush1.msra.mxu0 %v1511
    %1513 = vmatprep.subr.mxu0 0.0
    %v1514 = vand.u32 %v1480, 4294901760
    %1515 = vmatpush1.msra.mxu0 %v1514
    %1516 = vmatprep.subr.mxu0 0.0
    %v1517 = vand.u32 %v1481, 4294901760
    %1518 = vmatpush1.msra.mxu0 %v1517
    %1519 = vmatprep.subr.mxu0 0.0
    %v1520 = vand.u32 %v1482, 4294901760
    %1521 = vmatpush1.msra.mxu0 %v1520
    %1522 = vmatprep.subr.mxu0 0.0
    %v1523 = vand.u32 %v1483, 4294901760
    %1524 = vmatpush1.msra.mxu0 %v1523
    %1525 = vmatprep.subr.mxu0 0.0
    %v1526 = vand.u32 %v1484, 4294901760
    %1527 = vmatpush1.msra.mxu0 %v1526
    %1528 = vmatprep.subr.mxu0 0.0
    %v1529 = vand.u32 %v1485, 4294901760
    %1530 = vmatpush1.msra.mxu0 %v1529
    %1531 = vmatprep.subr.mxu0 0.0
    %v1532 = vand.u32 %v1486, 4294901760
    %1533 = vmatpush1.msra.mxu0 %v1532
    %1534 = vmatprep.subr.mxu0 0.0
    %v1535 = vand.u32 %v1487, 4294901760
    %1536 = vmatpush1.msra.mxu0 %v1535
    %1537 = vmatprep.subr.mxu0 0.0
    %v1538 = vand.u32 %v1488, 4294901760
    %1539 = vmatpush1.msra.mxu0 %v1538
    %1540 = vmatprep.subr.mxu0 0.0
    %v1541 = vand.u32 %v1489, 4294901760
    %1542 = vmatpush1.msra.mxu0 %v1541
    %1543 = vmatprep.subr.mxu0 0.0
    %1544 = vmatpush1.msra.mxu0 0.0
    %1545 = vmatprep.subr.mxu0 0.0
    %1546 = vmatpush1.msra.mxu0 0.0
    %1547 = vmatprep.subr.mxu0 0.0
    %1548 = vmatpush1.msra.mxu0 0.0
    %1549 = vmatprep.subr.mxu0 0.0
    %1550 = vmatpush1.msra.mxu0 0.0
    %1551 = vmatprep.subr.mxu0 0.0
    %1552 = vmatpush1.msra.mxu0 0.0
    %1553 = vmatprep.subr.mxu0 0.0
    %1554 = vmatpush1.msra.mxu0 0.0
    %1555 = vmatprep.subr.mxu0 0.0
    %1556 = vmatpush1.msra.mxu0 0.0
    %1557 = vmatprep.subr.mxu0 0.0
    %1558 = vmatpush1.msra.mxu0 0.0
    %1559 = vmatprep.subr.mxu0 0.0
    %1560 = vmatpush1.msra.mxu0 0.0
    %1561 = vmatprep.subr.mxu0 0.0
    %1562 = vmatpush1.msra.mxu0 0.0
    %1563 = vmatprep.subr.mxu0 0.0
    %1564 = vmatpush1.msra.mxu0 0.0
    %1565 = vmatprep.subr.mxu0 0.0
    %1566 = vmatpush1.msra.mxu0 0.0
    %1567 = vmatprep.subr.mxu0 0.0
    %1568 = vmatpush1.msra.mxu0 0.0
    %1569 = vmatprep.subr.mxu0 0.0
    %1570 = vmatpush1.msra.mxu0 0.0
    %1571 = vmatprep.subr.mxu0 0.0
    %1572 = vmatpush1.msra.mxu0 0.0
    %1573 = vmatprep.subr.mxu0 0.0
    %1574 = vmatpush1.msra.mxu0 0.0
    %1575 = vmatprep.mubr.f32.mxu0 0.0
    %v1576 = vand.u32 %v1472, 4294901760
    %v1577 = vsub.f32 %v1472, %v1576
    %v1578 = vand.u32 %v1577, 4294901760
    %v1579 = vsub.f32 %v1577, %v1578
    %v1580 = vand.u32 %v1579, 4294901760
    %1581 = vmatmul.mubr.f32.gmra.mrb[0].mxu0 %v1580
    %v1582 = vpop.f32.mrb[0].mxu0
    %v1583 = vadd.f32 %v1494, %v1582
    %v1584 = vpop.f32.mrb[0].mxu0
    %1585 = vdwg.mxu0
    %1586 = vmatprep.subr.mxu0 0.0
    %v1587 = vand.u32 %v1474, 4294901760
    %v1588 = vsub.f32 %v1474, %v1587
    %v1589 = vand.u32 %v1588, 4294901760
    %v1590 = vsub.f32 %v1588, %v1589
    %v1591 = vand.u32 %v1590, 4294901760
    %1592 = vmatpush1.msra.mxu0 %v1591
    %1593 = vmatprep.subr.mxu0 0.0
    %v1594 = vand.u32 %v1475, 4294901760
    %v1595 = vsub.f32 %v1475, %v1594
    %v1596 = vand.u32 %v1595, 4294901760
    %v1597 = vsub.f32 %v1595, %v1596
    %v1598 = vand.u32 %v1597, 4294901760
    %1599 = vmatpush1.msra.mxu0 %v1598
    %1600 = vmatprep.subr.mxu0 0.0
    %v1601 = vand.u32 %v1476, 4294901760
    %v1602 = vsub.f32 %v1476, %v1601
    %v1603 = vand.u32 %v1602, 4294901760
    %v1604 = vsub.f32 %v1602, %v1603
    %v1605 = vand.u32 %v1604, 4294901760
    %1606 = vmatpush1.msra.mxu0 %v1605
    %1607 = vmatprep.subr.mxu0 0.0
    %v1608 = vand.u32 %v1477, 4294901760
    %v1609 = vsub.f32 %v1477, %v1608
    %v1610 = vand.u32 %v1609, 4294901760
    %v1611 = vsub.f32 %v1609, %v1610
    %v1612 = vand.u32 %v1611, 4294901760
    %1613 = vmatpush1.msra.mxu0 %v1612
    %1614 = vmatprep.subr.mxu0 0.0
    %v1615 = vand.u32 %v1478, 4294901760
    %v1616 = vsub.f32 %v1478, %v1615
    %v1617 = vand.u32 %v1616, 4294901760
    %v1618 = vsub.f32 %v1616, %v1617
    %v1619 = vand.u32 %v1618, 4294901760
    %1620 = vmatpush1.msra.mxu0 %v1619
    %1621 = vmatprep.subr.mxu0 0.0
    %v1622 = vand.u32 %v1479, 4294901760
    %v1623 = vsub.f32 %v1479, %v1622
    %v1624 = vand.u32 %v1623, 4294901760
    %v1625 = vsub.f32 %v1623, %v1624
    %v1626 = vand.u32 %v1625, 4294901760
    %1627 = vmatpush1.msra.mxu0 %v1626
    %1628 = vmatprep.subr.mxu0 0.0
    %v1629 = vand.u32 %v1480, 4294901760
    %v1630 = vsub.f32 %v1480, %v1629
    %v1631 = vand.u32 %v1630, 4294901760
    %v1632 = vsub.f32 %v1630, %v1631
    %v1633 = vand.u32 %v1632, 4294901760
    %1634 = vmatpush1.msra.mxu0 %v1633
    %1635 = vmatprep.subr.mxu0 0.0
    %v1636 = vand.u32 %v1481, 4294901760
    %v1637 = vsub.f32 %v1481, %v1636
    %v1638 = vand.u32 %v1637, 4294901760
    %v1639 = vsub.f32 %v1637, %v1638
    %v1640 = vand.u32 %v1639, 4294901760
    %1641 = vmatpush1.msra.mxu0 %v1640
    %1642 = vmatprep.subr.mxu0 0.0
    %v1643 = vand.u32 %v1482, 4294901760
    %v1644 = vsub.f32 %v1482, %v1643
    %v1645 = vand.u32 %v1644, 4294901760
    %v1646 = vsub.f32 %v1644, %v1645
    %v1647 = vand.u32 %v1646, 4294901760
    %1648 = vmatpush1.msra.mxu0 %v1647
    %1649 = vmatprep.subr.mxu0 0.0
    %v1650 = vand.u32 %v1483, 4294901760
    %v1651 = vsub.f32 %v1483, %v1650
    %v1652 = vand.u32 %v1651, 4294901760
    %v1653 = vsub.f32 %v1651, %v1652
    %v1654 = vand.u32 %v1653, 4294901760
    %1655 = vmatpush1.msra.mxu0 %v1654
    %1656 = vmatprep.subr.mxu0 0.0
    %v1657 = vand.u32 %v1484, 4294901760
    %v1658 = vsub.f32 %v1484, %v1657
    %v1659 = vand.u32 %v1658, 4294901760
    %v1660 = vsub.f32 %v1658, %v1659
    %v1661 = vand.u32 %v1660, 4294901760
    %1662 = vmatpush1.msra.mxu0 %v1661
    %1663 = vmatprep.subr.mxu0 0.0
    %v1664 = vand.u32 %v1485, 4294901760
    %v1665 = vsub.f32 %v1485, %v1664
    %v1666 = vand.u32 %v1665, 4294901760
    %v1667 = vsub.f32 %v1665, %v1666
    %v1668 = vand.u32 %v1667, 4294901760
    %1669 = vmatpush1.msra.mxu0 %v1668
    %1670 = vmatprep.subr.mxu0 0.0
    %v1671 = vand.u32 %v1486, 4294901760
    %v1672 = vsub.f32 %v1486, %v1671
    %v1673 = vand.u32 %v1672, 4294901760
    %v1674 = vsub.f32 %v1672, %v1673
    %v1675 = vand.u32 %v1674, 4294901760
    %1676 = vmatpush1.msra.mxu0 %v1675
    %1677 = vmatprep.subr.mxu0 0.0
    %v1678 = vand.u32 %v1487, 4294901760
    %v1679 = vsub.f32 %v1487, %v1678
    %v1680 = vand.u32 %v1679, 4294901760
    %v1681 = vsub.f32 %v1679, %v1680
    %v1682 = vand.u32 %v1681, 4294901760
    %1683 = vmatpush1.msra.mxu0 %v1682
    %1684 = vmatprep.subr.mxu0 0.0
    %v1685 = vand.u32 %v1488, 4294901760
    %v1686 = vsub.f32 %v1488, %v1685
    %v1687 = vand.u32 %v1686, 4294901760
    %v1688 = vsub.f32 %v1686, %v1687
    %v1689 = vand.u32 %v1688, 4294901760
    %1690 = vmatpush1.msra.mxu0 %v1689
    %1691 = vmatprep.subr.mxu0 0.0
    %v1692 = vand.u32 %v1489, 4294901760
    %v1693 = vsub.f32 %v1489, %v1692
    %v1694 = vand.u32 %v1693, 4294901760
    %v1695 = vsub.f32 %v1693, %v1694
    %v1696 = vand.u32 %v1695, 4294901760
    %1697 = vmatpush1.msra.mxu0 %v1696
    %1698 = vmatprep.subr.mxu0 0.0
    %1699 = vmatpush1.msra.mxu0 0.0
    %1700 = vmatprep.subr.mxu0 0.0
    %1701 = vmatpush1.msra.mxu0 0.0
    %1702 = vmatprep.subr.mxu0 0.0
    %1703 = vmatpush1.msra.mxu0 0.0
    %1704 = vmatprep.subr.mxu0 0.0
    %1705 = vmatpush1.msra.mxu0 0.0
    %1706 = vmatprep.subr.mxu0 0.0
    %1707 = vmatpush1.msra.mxu0 0.0
    %1708 = vmatprep.subr.mxu0 0.0
    %1709 = vmatpush1.msra.mxu0 0.0
    %1710 = vmatprep.subr.mxu0 0.0
    %1711 = vmatpush1.msra.mxu0 0.0
    %1712 = vmatprep.subr.mxu0 0.0
    %1713 = vmatpush1.msra.mxu0 0.0
    %1714 = vmatprep.subr.mxu0 0.0
    %1715 = vmatpush1.msra.mxu0 0.0
    %1716 = vmatprep.subr.mxu0 0.0
    %1717 = vmatpush1.msra.mxu0 0.0
    %1718 = vmatprep.subr.mxu0 0.0
    %1719 = vmatpush1.msra.mxu0 0.0
    %1720 = vmatprep.subr.mxu0 0.0
    %1721 = vmatpush1.msra.mxu0 0.0
    %1722 = vmatprep.subr.mxu0 0.0
    %1723 = vmatpush1.msra.mxu0 0.0
    %1724 = vmatprep.subr.mxu0 0.0
    %1725 = vmatpush1.msra.mxu0 0.0
    %1726 = vmatprep.subr.mxu0 0.0
    %1727 = vmatpush1.msra.mxu0 0.0
    %1728 = vmatprep.subr.mxu0 0.0
    %1729 = vmatpush1.msra.mxu0 0.0
    %1730 = vmatprep.mubr.f32.mxu0 0.0
    %v1731 = vand.u32 %v1472, 4294901760
    %1732 = vmatmul.mubr.f32.gmra.mrb[0].mxu0 %v1731
    %v1733 = vpop.f32.mrb[0].mxu0
    %v1734 = vadd.f32 %v1583, %v1733
    %v1735 = vpop.f32.mrb[0].mxu0
    %1736 = vdwg.mxu0
    %1737 = vmatprep.subr.mxu0 0.0
    %v1738 = vand.u32 %v1474, 4294901760
    %v1739 = vsub.f32 %v1474, %v1738
    %1740 = vmatpush1.msra.mxu0 %v1739
    %1741 = vmatprep.subr.mxu0 0.0
    %v1742 = vand.u32 %v1475, 4294901760
    %v1743 = vsub.f32 %v1475, %v1742
    %1744 = vmatpush1.msra.mxu0 %v1743
    %1745 = vmatprep.subr.mxu0 0.0
    %v1746 = vand.u32 %v1476, 4294901760
    %v1747 = vsub.f32 %v1476, %v1746
    %1748 = vmatpush1.msra.mxu0 %v1747
    %1749 = vmatprep.subr.mxu0 0.0
    %v1750 = vand.u32 %v1477, 4294901760
    %v1751 = vsub.f32 %v1477, %v1750
    %1752 = vmatpush1.msra.mxu0 %v1751
    %1753 = vmatprep.subr.mxu0 0.0
    %v1754 = vand.u32 %v1478, 4294901760
    %v1755 = vsub.f32 %v1478, %v1754
    %1756 = vmatpush1.msra.mxu0 %v1755
    %1757 = vmatprep.subr.mxu0 0.0
    %v1758 = vand.u32 %v1479, 4294901760
    %v1759 = vsub.f32 %v1479, %v1758
    %1760 = vmatpush1.msra.mxu0 %v1759
    %1761 = vmatprep.subr.mxu0 0.0
    %v1762 = vand.u32 %v1480, 4294901760
    %v1763 = vsub.f32 %v1480, %v1762
    %1764 = vmatpush1.msra.mxu0 %v1763
    %1765 = vmatprep.subr.mxu0 0.0
    %v1766 = vand.u32 %v1481, 4294901760
    %v1767 = vsub.f32 %v1481, %v1766
    %1768 = vmatpush1.msra.mxu0 %v1767
    %1769 = vmatprep.subr.mxu0 0.0
    %v1770 = vand.u32 %v1482, 4294901760
    %v1771 = vsub.f32 %v1482, %v1770
    %1772 = vmatpush1.msra.mxu0 %v1771
    %1773 = vmatprep.subr.mxu0 0.0
    %v1774 = vand.u32 %v1483, 4294901760
    %v1775 = vsub.f32 %v1483, %v1774
    %1776 = vmatpush1.msra.mxu0 %v1775
    %1777 = vmatprep.subr.mxu0 0.0
    %v1778 = vand.u32 %v1484, 4294901760
    %v1779 = vsub.f32 %v1484, %v1778
    %1780 = vmatpush1.msra.mxu0 %v1779
    %1781 = vmatprep.subr.mxu0 0.0
    %v1782 = vand.u32 %v1485, 4294901760
    %v1783 = vsub.f32 %v1485, %v1782
    %1784 = vmatpush1.msra.mxu0 %v1783
    %1785 = vmatprep.subr.mxu0 0.0
    %v1786 = vand.u32 %v1486, 4294901760
    %v1787 = vsub.f32 %v1486, %v1786
    %1788 = vmatpush1.msra.mxu0 %v1787
    %1789 = vmatprep.subr.mxu0 0.0
    %v1790 = vand.u32 %v1487, 4294901760
    %v1791 = vsub.f32 %v1487, %v1790
    %1792 = vmatpush1.msra.mxu0 %v1791
    %1793 = vmatprep.subr.mxu0 0.0
    %v1794 = vand.u32 %v1488, 4294901760
    %v1795 = vsub.f32 %v1488, %v1794
    %1796 = vmatpush1.msra.mxu0 %v1795
    %1797 = vmatprep.subr.mxu0 0.0
    %v1798 = vand.u32 %v1489, 4294901760
    %v1799 = vsub.f32 %v1489, %v1798
    %1800 = vmatpush1.msra.mxu0 %v1799
    %1801 = vmatprep.subr.mxu0 0.0
    %1802 = vmatpush1.msra.mxu0 0.0
    %1803 = vmatprep.subr.mxu0 0.0
    %1804 = vmatpush1.msra.mxu0 0.0
    %1805 = vmatprep.subr.mxu0 0.0
    %1806 = vmatpush1.msra.mxu0 0.0
    %1807 = vmatprep.subr.mxu0 0.0
    %1808 = vmatpush1.msra.mxu0 0.0
    %1809 = vmatprep.subr.mxu0 0.0
    %1810 = vmatpush1.msra.mxu0 0.0
    %1811 = vmatprep.subr.mxu0 0.0
    %1812 = vmatpush1.msra.mxu0 0.0
    %1813 = vmatprep.subr.mxu0 0.0
    %1814 = vmatpush1.msra.mxu0 0.0
    %1815 = vmatprep.subr.mxu0 0.0
    %1816 = vmatpush1.msra.mxu0 0.0
    %1817 = vmatprep.subr.mxu0 0.0
    %1818 = vmatpush1.msra.mxu0 0.0
    %1819 = vmatprep.subr.mxu0 0.0
    %1820 = vmatpush1.msra.mxu0 0.0
    %1821 = vmatprep.subr.mxu0 0.0
    %1822 = vmatpush1.msra.mxu0 0.0
    %1823 = vmatprep.subr.mxu0 0.0
    %1824 = vmatpush1.msra.mxu0 0.0
    %1825 = vmatprep.subr.mxu0 0.0
    %1826 = vmatpush1.msra.mxu0 0.0
    %1827 = vmatprep.subr.mxu0 0.0
    %1828 = vmatpush1.msra.mxu0 0.0
    %1829 = vmatprep.subr.mxu0 0.0
    %1830 = vmatpush1.msra.mxu0 0.0
    %1831 = vmatprep.subr.mxu0 0.0
    %1832 = vmatpush1.msra.mxu0 0.0
    %1833 = vmatprep.mubr.f32.mxu0 0.0
    %v1834 = vand.u32 %v1472, 4294901760
    %v1835 = vsub.f32 %v1472, %v1834
    %1836 = vmatmul.mubr.f32.gmra.mrb[0].mxu0 %v1835
    %v1837 = vpop.f32.mrb[0].mxu0
    %v1838 = vadd.f32 %v1734, %v1837
    %v1839 = vpop.f32.mrb[0].mxu0
    %1840 = vdwg.mxu0
    %1841 = vmatprep.subr.mxu0 0.0
    %v1842 = vand.u32 %v1474, 4294901760
    %1843 = vmatpush1.msra.mxu0 %v1842
    %1844 = vmatprep.subr.mxu0 0.0
    %v1845 = vand.u32 %v1475, 4294901760
    %1846 = vmatpush1.msra.mxu0 %v1845
    %1847 = vmatprep.subr.mxu0 0.0
    %v1848 = vand.u32 %v1476, 4294901760
    %1849 = vmatpush1.msra.mxu0 %v1848
    %1850 = vmatprep.subr.mxu0 0.0
    %v1851 = vand.u32 %v1477, 4294901760
    %1852 = vmatpush1.msra.mxu0 %v1851
    %1853 = vmatprep.subr.mxu0 0.0
    %v1854 = vand.u32 %v1478, 4294901760
    %1855 = vmatpush1.msra.mxu0 %v1854
    %1856 = vmatprep.subr.mxu0 0.0
    %v1857 = vand.u32 %v1479, 4294901760
    %1858 = vmatpush1.msra.mxu0 %v1857
    %1859 = vmatprep.subr.mxu0 0.0
    %v1860 = vand.u32 %v1480, 4294901760
    %1861 = vmatpush1.msra.mxu0 %v1860
    %1862 = vmatprep.subr.mxu0 0.0
    %v1863 = vand.u32 %v1481, 4294901760
    %1864 = vmatpush1.msra.mxu0 %v1863
    %1865 = vmatprep.subr.mxu0 0.0
    %v1866 = vand.u32 %v1482, 4294901760
    %1867 = vmatpush1.msra.mxu0 %v1866
    %1868 = vmatprep.subr.mxu0 0.0
    %v1869 = vand.u32 %v1483, 4294901760
    %1870 = vmatpush1.msra.mxu0 %v1869
    %1871 = vmatprep.subr.mxu0 0.0
    %v1872 = vand.u32 %v1484, 4294901760
    %1873 = vmatpush1.msra.mxu0 %v1872
    %1874 = vmatprep.subr.mxu0 0.0
    %v1875 = vand.u32 %v1485, 4294901760
    %1876 = vmatpush1.msra.mxu0 %v1875
    %1877 = vmatprep.subr.mxu0 0.0
    %v1878 = vand.u32 %v1486, 4294901760
    %1879 = vmatpush1.msra.mxu0 %v1878
    %1880 = vmatprep.subr.mxu0 0.0
    %v1881 = vand.u32 %v1487, 4294901760
    %1882 = vmatpush1.msra.mxu0 %v1881
    %1883 = vmatprep.subr.mxu0 0.0
    %v1884 = vand.u32 %v1488, 4294901760
    %1885 = vmatpush1.msra.mxu0 %v1884
    %1886 = vmatprep.subr.mxu0 0.0
    %v1887 = vand.u32 %v1489, 4294901760
    %1888 = vmatpush1.msra.mxu0 %v1887
    %1889 = vmatprep.subr.mxu0 0.0
    %1890 = vmatpush1.msra.mxu0 0.0
    %1891 = vmatprep.subr.mxu0 0.0
    %1892 = vmatpush1.msra.mxu0 0.0
    %1893 = vmatprep.subr.mxu0 0.0
    %1894 = vmatpush1.msra.mxu0 0.0
    %1895 = vmatprep.subr.mxu0 0.0
    %1896 = vmatpush1.msra.mxu0 0.0
    %1897 = vmatprep.subr.mxu0 0.0
    %1898 = vmatpush1.msra.mxu0 0.0
    %1899 = vmatprep.subr.mxu0 0.0
    %1900 = vmatpush1.msra.mxu0 0.0
    %1901 = vmatprep.subr.mxu0 0.0
    %1902 = vmatpush1.msra.mxu0 0.0
    %1903 = vmatprep.subr.mxu0 0.0
    %1904 = vmatpush1.msra.mxu0 0.0
    %1905 = vmatprep.subr.mxu0 0.0
    %1906 = vmatpush1.msra.mxu0 0.0
    %1907 = vmatprep.subr.mxu0 0.0
    %1908 = vmatpush1.msra.mxu0 0.0
    %1909 = vmatprep.subr.mxu0 0.0
    %1910 = vmatpush1.msra.mxu0 0.0
    %1911 = vmatprep.subr.mxu0 0.0
    %1912 = vmatpush1.msra.mxu0 0.0
    %1913 = vmatprep.subr.mxu0 0.0
    %1914 = vmatpush1.msra.mxu0 0.0
    %1915 = vmatprep.subr.mxu0 0.0
    %1916 = vmatpush1.msra.mxu0 0.0
    %1917 = vmatprep.subr.mxu0 0.0
    %1918 = vmatpush1.msra.mxu0 0.0
    %1919 = vmatprep.subr.mxu0 0.0
    %1920 = vmatpush1.msra.mxu0 0.0
    %1921 = vmatprep.mubr.f32.mxu0 0.0
    %v1922 = vand.u32 %v1472, 4294901760
    %v1923 = vsub.f32 %v1472, %v1922
    %v1924 = vand.u32 %v1923, 4294901760
    %1925 = vmatmul.mubr.f32.gmra.mrb[0].mxu0 %v1924
    %v1926 = vpop.f32.mrb[0].mxu0
    %v1927 = vadd.f32 %v1838, %v1926
    %v1928 = vpop.f32.mrb[0].mxu0
    %1929 = vdwg.mxu0
    %1930 = vmatprep.subr.mxu0 0.0
    %v1931 = vand.u32 %v1474, 4294901760
    %v1932 = vsub.f32 %v1474, %v1931
    %v1933 = vand.u32 %v1932, 4294901760
    %1934 = vmatpush1.msra.mxu0 %v1933
    %1935 = vmatprep.subr.mxu0 0.0
    %v1936 = vand.u32 %v1475, 4294901760
    %v1937 = vsub.f32 %v1475, %v1936
    %v1938 = vand.u32 %v1937, 4294901760
    %1939 = vmatpush1.msra.mxu0 %v1938
    %1940 = vmatprep.subr.mxu0 0.0
    %v1941 = vand.u32 %v1476, 4294901760
    %v1942 = vsub.f32 %v1476, %v1941
    %v1943 = vand.u32 %v1942, 4294901760
    %1944 = vmatpush1.msra.mxu0 %v1943
    %1945 = vmatprep.subr.mxu0 0.0
    %v1946 = vand.u32 %v1477, 4294901760
    %v1947 = vsub.f32 %v1477, %v1946
    %v1948 = vand.u32 %v1947, 4294901760
    %1949 = vmatpush1.msra.mxu0 %v1948
    %1950 = vmatprep.subr.mxu0 0.0
    %v1951 = vand.u32 %v1478, 4294901760
    %v1952 = vsub.f32 %v1478, %v1951
    %v1953 = vand.u32 %v1952, 4294901760
    %1954 = vmatpush1.msra.mxu0 %v1953
    %1955 = vmatprep.subr.mxu0 0.0
    %v1956 = vand.u32 %v1479, 4294901760
    %v1957 = vsub.f32 %v1479, %v1956
    %v1958 = vand.u32 %v1957, 4294901760
    %1959 = vmatpush1.msra.mxu0 %v1958
    %1960 = vmatprep.subr.mxu0 0.0
    %v1961 = vand.u32 %v1480, 4294901760
    %v1962 = vsub.f32 %v1480, %v1961
    %v1963 = vand.u32 %v1962, 4294901760
    %1964 = vmatpush1.msra.mxu0 %v1963
    %1965 = vmatprep.subr.mxu0 0.0
    %v1966 = vand.u32 %v1481, 4294901760
    %v1967 = vsub.f32 %v1481, %v1966
    %v1968 = vand.u32 %v1967, 4294901760
    %1969 = vmatpush1.msra.mxu0 %v1968
    %1970 = vmatprep.subr.mxu0 0.0
    %v1971 = vand.u32 %v1482, 4294901760
    %v1972 = vsub.f32 %v1482, %v1971
    %v1973 = vand.u32 %v1972, 4294901760
    %1974 = vmatpush1.msra.mxu0 %v1973
    %1975 = vmatprep.subr.mxu0 0.0
    %v1976 = vand.u32 %v1483, 4294901760
    %v1977 = vsub.f32 %v1483, %v1976
    %v1978 = vand.u32 %v1977, 4294901760
    %1979 = vmatpush1.msra.mxu0 %v1978
    %1980 = vmatprep.subr.mxu0 0.0
    %v1981 = vand.u32 %v1484, 4294901760
    %v1982 = vsub.f32 %v1484, %v1981
    %v1983 = vand.u32 %v1982, 4294901760
    %1984 = vmatpush1.msra.mxu0 %v1983
    %1985 = vmatprep.subr.mxu0 0.0
    %v1986 = vand.u32 %v1485, 4294901760
    %v1987 = vsub.f32 %v1485, %v1986
    %v1988 = vand.u32 %v1987, 4294901760
    %1989 = vmatpush1.msra.mxu0 %v1988
    %1990 = vmatprep.subr.mxu0 0.0
    %v1991 = vand.u32 %v1486, 4294901760
    %v1992 = vsub.f32 %v1486, %v1991
    %v1993 = vand.u32 %v1992, 4294901760
    %1994 = vmatpush1.msra.mxu0 %v1993
    %1995 = vmatprep.subr.mxu0 0.0
    %v1996 = vand.u32 %v1487, 4294901760
    %v1997 = vsub.f32 %v1487, %v1996
    %v1998 = vand.u32 %v1997, 4294901760
    %1999 = vmatpush1.msra.mxu0 %v1998
    %2000 = vmatprep.subr.mxu0 0.0
    %v2001 = vand.u32 %v1488, 4294901760
    %v2002 = vsub.f32 %v1488, %v2001
    %v2003 = vand.u32 %v2002, 4294901760
    %2004 = vmatpush1.msra.mxu0 %v2003
    %2005 = vmatprep.subr.mxu0 0.0
    %v2006 = vand.u32 %v1489, 4294901760
    %v2007 = vsub.f32 %v1489, %v2006
    %v2008 = vand.u32 %v2007, 4294901760
    %2009 = vmatpush1.msra.mxu0 %v2008
    %2010 = vmatprep.subr.mxu0 0.0
    %2011 = vmatpush1.msra.mxu0 0.0
    %2012 = vmatprep.subr.mxu0 0.0
    %2013 = vmatpush1.msra.mxu0 0.0
    %2014 = vmatprep.subr.mxu0 0.0
    %2015 = vmatpush1.msra.mxu0 0.0
    %2016 = vmatprep.subr.mxu0 0.0
    %2017 = vmatpush1.msra.mxu0 0.0
    %2018 = vmatprep.subr.mxu0 0.0
    %2019 = vmatpush1.msra.mxu0 0.0
    %2020 = vmatprep.subr.mxu0 0.0
    %2021 = vmatpush1.msra.mxu0 0.0
    %2022 = vmatprep.subr.mxu0 0.0
    %2023 = vmatpush1.msra.mxu0 0.0
    %2024 = vmatprep.subr.mxu0 0.0
    %2025 = vmatpush1.msra.mxu0 0.0
    %2026 = vmatprep.subr.mxu0 0.0
    %2027 = vmatpush1.msra.mxu0 0.0
    %2028 = vmatprep.subr.mxu0 0.0
    %2029 = vmatpush1.msra.mxu0 0.0
    %2030 = vmatprep.subr.mxu0 0.0
    %2031 = vmatpush1.msra.mxu0 0.0
    %2032 = vmatprep.subr.mxu0 0.0
    %2033 = vmatpush1.msra.mxu0 0.0
    %2034 = vmatprep.subr.mxu0 0.0
    %2035 = vmatpush1.msra.mxu0 0.0
    %2036 = vmatprep.subr.mxu0 0.0
    %2037 = vmatpush1.msra.mxu0 0.0
    %2038 = vmatprep.subr.mxu0 0.0
    %2039 = vmatpush1.msra.mxu0 0.0
    %2040 = vmatprep.subr.mxu0 0.0
    %2041 = vmatpush1.msra.mxu0 0.0
    %2042 = vmatprep.mubr.f32.mxu0 0.0
    %v2043 = vand.u32 %v1472, 4294901760
    %2044 = vmatmul.mubr.f32.gmra.mrb[0].mxu0 %v2043
    %v2045 = vpop.f32.mrb[0].mxu0
    %v2046 = vadd.f32 %v1927, %v2045
    %v2047 = vpop.f32.mrb[0].mxu0
    %2048 = vdwg.mxu0
    %2049 = vmatprep.subr.mxu0 0.0
    %v2050 = vand.u32 %v1474, 4294901760
    %2051 = vmatpush1.msra.mxu0 %v2050
    %2052 = vmatprep.subr.mxu0 0.0
    %v2053 = vand.u32 %v1475, 4294901760
    %2054 = vmatpush1.msra.mxu0 %v2053
    %2055 = vmatprep.subr.mxu0 0.0
    %v2056 = vand.u32 %v1476, 4294901760
    %2057 = vmatpush1.msra.mxu0 %v2056
    %2058 = vmatprep.subr.mxu0 0.0
    %v2059 = vand.u32 %v1477, 4294901760
    %2060 = vmatpush1.msra.mxu0 %v2059
    %2061 = vmatprep.subr.mxu0 0.0
    %v2062 = vand.u32 %v1478, 4294901760
    %2063 = vmatpush1.msra.mxu0 %v2062
    %2064 = vmatprep.subr.mxu0 0.0
    %v2065 = vand.u32 %v1479, 4294901760
    %2066 = vmatpush1.msra.mxu0 %v2065
    %2067 = vmatprep.subr.mxu0 0.0
    %v2068 = vand.u32 %v1480, 4294901760
    %2069 = vmatpush1.msra.mxu0 %v2068
    %2070 = vmatprep.subr.mxu0 0.0
    %v2071 = vand.u32 %v1481, 4294901760
    %2072 = vmatpush1.msra.mxu0 %v2071
    %2073 = vmatprep.subr.mxu0 0.0
    %v2074 = vand.u32 %v1482, 4294901760
    %2075 = vmatpush1.msra.mxu0 %v2074
    %2076 = vmatprep.subr.mxu0 0.0
    %v2077 = vand.u32 %v1483, 4294901760
    %2078 = vmatpush1.msra.mxu0 %v2077
    %2079 = vmatprep.subr.mxu0 0.0
    %v2080 = vand.u32 %v1484, 4294901760
    %2081 = vmatpush1.msra.mxu0 %v2080
    %2082 = vmatprep.subr.mxu0 0.0
    %v2083 = vand.u32 %v1485, 4294901760
    %2084 = vmatpush1.msra.mxu0 %v2083
    %2085 = vmatprep.subr.mxu0 0.0
    %v2086 = vand.u32 %v1486, 4294901760
    %2087 = vmatpush1.msra.mxu0 %v2086
    %2088 = vmatprep.subr.mxu0 0.0
    %v2089 = vand.u32 %v1487, 4294901760
    %2090 = vmatpush1.msra.mxu0 %v2089
    %2091 = vmatprep.subr.mxu0 0.0
    %v2092 = vand.u32 %v1488, 4294901760
    %2093 = vmatpush1.msra.mxu0 %v2092
    %2094 = vmatprep.subr.mxu0 0.0
    %v2095 = vand.u32 %v1489, 4294901760
    %2096 = vmatpush1.msra.mxu0 %v2095
    %2097 = vmatprep.subr.mxu0 0.0
    %2098 = vmatpush1.msra.mxu0 0.0
    %2099 = vmatprep.subr.mxu0 0.0
    %2100 = vmatpush1.msra.mxu0 0.0
    %2101 = vmatprep.subr.mxu0 0.0
    %2102 = vmatpush1.msra.mxu0 0.0
    %2103 = vmatprep.subr.mxu0 0.0
    %2104 = vmatpush1.msra.mxu0 0.0
    %2105 = vmatprep.subr.mxu0 0.0
    %2106 = vmatpush1.msra.mxu0 0.0
    %2107 = vmatprep.subr.mxu0 0.0
    %2108 = vmatpush1.msra.mxu0 0.0
    %2109 = vmatprep.subr.mxu0 0.0
    %2110 = vmatpush1.msra.mxu0 0.0
    %2111 = vmatprep.subr.mxu0 0.0
    %2112 = vmatpush1.msra.mxu0 0.0
    %2113 = vmatprep.subr.mxu0 0.0
    %2114 = vmatpush1.msra.mxu0 0.0
    %2115 = vmatprep.subr.mxu0 0.0
    %2116 = vmatpush1.msra.mxu0 0.0
    %2117 = vmatprep.subr.mxu0 0.0
    %2118 = vmatpush1.msra.mxu0 0.0
    %2119 = vmatprep.subr.mxu0 0.0
    %2120 = vmatpush1.msra.mxu0 0.0
    %2121 = vmatprep.subr.mxu0 0.0
    %2122 = vmatpush1.msra.mxu0 0.0
    %2123 = vmatprep.subr.mxu0 0.0
    %2124 = vmatpush1.msra.mxu0 0.0
    %2125 = vmatprep.subr.mxu0 0.0
    %2126 = vmatpush1.msra.mxu0 0.0
    %2127 = vmatprep.subr.mxu0 0.0
    %2128 = vmatpush1.msra.mxu0 0.0
    %2129 = vmatprep.mubr.f32.mxu0 0.0
    %v2130 = vand.u32 %v1472, 4294901760
    %2131 = vmatmul.mubr.f32.gmra.mrb[0].mxu0 %v2130
    %v2132 = vpop.f32.mrb[0].mxu0
    %v2133 = vadd.f32 %v2046, %v2132
    %v2134 = vpop.f32.mrb[0].mxu0
    %2135 = vdwg.mxu0
    %v2136 = vmax.f32 %v2133, 0.0
    %2137 = vadd.xlane.f32.xlu0 %v2136
    %v2138 = vpop.xlane.xlu0 %2137
    %v2139 = vmul.f32 %v2138, 0.03125
    %v2140 = vsub.f32 %v2136, %v2139
    %v2141 = vlaneseq
    %v2142 = vshrl.u32 %v2141, 7
    %v2143 = vsub.s32 3, %v2142
    %v2144 = vrot.slane %v1490, %v2143
    %v2145 = vmul.f32 %v2140, %v2144
    %v2146 = vmul.f32 %v2145, %v2145
    %2147 = vadd.xlane.f32.xlu0 %v2146
    %v2148 = vpop.xlane.xlu0 %2147
    %v2149 = vmul.f32 %v2148, 0.03125
    %v2150 = vadd.f32 %v2149, 1e-05
    %v2151 = vrsqrt.pop %v2150
    %v2152 = vmul.f32 %v2145, %v2151
    %v2153 = vlaneseq
    %v2154 = vshrl.u32 %v2153, 7
    %v2155 = vsub.s32 1, %v2154
    %v2156 = vrot.slane %v1490, %v2155
    %v2157 = vmul.f32 %v2152, %v2156
    %v2158 = vlaneseq
    %v2159 = vshrl.u32 %v2158, 7
    %v2160 = vsub.s32 2, %v2159
    %v2161 = vrot.slane %v1490, %v2160
    %v2162 = vadd.f32 %v2157, %v2161
    %2163 = vst [vmem:[#allocation12] sm:$0xff] %v2162
    // Predicated region
    $region50: #{_mlp_stack_call.1} parent=1 // pred_check
      _
    $region51: #{_mlp_stack_call.1} parent=1 // pred_check_branch
      %2165 = sbr.rel (0) target = $region53
    $region52: #{_mlp_stack_call.1} parent=1 // pred_region
      %s2167 = ssub.s32 128, 128
      %2168 = vsyncadd [#allocation4], %s2167
      %s2170 = sshll.u32 [#allocation11], 4
      %s2171 = int_to_ptr.vmem [resolvable:$true] %s2170
      %2173 = dma.vmem_to_hbm [thread:$0]  %s2171, 128, %s7, [#allocation4]
    $region53: #{_mlp_stack_call.1} parent=1 // pred_fallthru
      _
    // Predicated region
    $region54: #{_mlp_stack_call.1} parent=1 // pred_check
      _
    $region55: #{_mlp_stack_call.1} parent=1 // pred_check_branch
      %2175 = sbr.rel (0) target = $region57
    $region56: #{_mlp_stack_call.1} parent=1 // pred_region
      %s2177 = ssub.s32 128, 128
      %2178 = vsyncadd [#allocation13], %s2177
      %s2180 = sshll.u32 [#allocation12], 4
      %s2181 = int_to_ptr.vmem [resolvable:$true] %s2180
      %2183 = dma.vmem_to_hbm [thread:$0]  %s2181, 128, %s8, [#allocation13]
    $region57: #{_mlp_stack_call.1} parent=1 // pred_fallthru
      _
    // Predicated region
    $region58: #{_mlp_stack_call.1} parent=1 // pred_check
      _
    $region59: #{_mlp_stack_call.1} parent=1 // pred_check_branch
      %2185 = sbr.rel (0) target = $region61
    $region60: #{_mlp_stack_call.1} parent=1 // pred_region
      %2186 = dma.done [#allocation4], 128
    $region61: #{_mlp_stack_call.1} parent=1 // pred_fallthru
      _
    // Predicated region
    $region62: #{_mlp_stack_call.1} parent=1 // pred_check
      _
    $region63: #{_mlp_stack_call.1} parent=1 // pred_check_branch
      %2188 = sbr.rel (0) target = $region65
    $region64: #{_mlp_stack_call.1} parent=1 // pred_region
      %2189 = dma.done [#allocation13], 128
    $region65: #{_mlp_stack_call.1} parent=1 // pred_fallthru
      _
    %2190 = vsyncpa [#allocation3], 1
    %2191 = vsyncpa [#allocation6], 1
    %2192 = vsyncpa [#allocation9], 1
    %2193 = vsyncpa [#allocation4], 1
    %2194 = vsyncpa [#allocation13], 1

</llo_original>
